<compile_context>
chip_gen: v7x
topology: tpu7x:2x2x1
jax: 0.10.0
libtpu: 0.0.40
codegen_flags: <defaults>
</compile_context>

<pallas_src>
import functools

import jax
import jax.numpy as jnp
from jax.experimental import pallas as pl
from jax.experimental.pallas import tpu as pltpu


def _fused_conv_block_kernel(x_ref, b1_ref, s1_ref, b2_ref, s2_ref, o_ref,
                             xp_ref, y1p_ref, *, NB, H):
    Hp = H + 2
    M = NB * Hp - 2          # matmul rows (2 junk junction rows per image gap)

    # ---- stage layer-1 input: zero ONLY the halo rows, copy the interiors ---
    zin = jnp.zeros((1, xp_ref.shape[1]), dtype=xp_ref.dtype)
    for n in range(NB):
        base = n * Hp
        xp_ref[pl.ds(base, 1), :] = zin
        xp_ref[pl.ds(base + H + 1, 1), :] = zin
        xp_ref[pl.ds(base + 1, H), :] = x_ref[n]

    # ---- layer 1: 3 banded MXU matmuls (bf16 x bf16 -> f32 accumulation) ----
    # (Optional per review: fuse into one K=3*W*Cin dot via a staging scratch;
    # skipped — the staging stores land at non-128-aligned lane offsets and
    # the K-fill gain is marginal at W*Cin = 64/128.)
    acc = jnp.dot(xp_ref[pl.ds(0, M), :], b1_ref[0],
                  preferred_element_type=jnp.float32)
    for dy in (1, 2):
        acc += jnp.dot(xp_ref[pl.ds(dy, M), :], b1_ref[dy],
                       preferred_element_type=jnp.float32)
    y1 = jnp.maximum(acc + s1_ref[...], 0.0).astype(y1p_ref.dtype)

    # ---- stage layer-2 input in VMEM (never touches HBM) --------------------
    zmid = jnp.zeros((1, y1p_ref.shape[1]), dtype=y1p_ref.dtype)
    for n in range(NB):
        base = n * Hp
        y1p_ref[pl.ds(base, 1), :] = zmid
        y1p_ref[pl.ds(base + H + 1, 1), :] = zmid
        y1p_ref[pl.ds(base + 1, H), :] = y1[base:base + H]

    # ---- layer 2 -------------------------------------------------------------
    acc = jnp.dot(y1p_ref[pl.ds(0, M), :], b2_ref[0],
                  preferred_element_type=jnp.float32)
    for dy in (1, 2):
        acc += jnp.dot(y1p_ref[pl.ds(dy, M), :], b2_ref[dy],
                       preferred_element_type=jnp.float32)
    y2 = jnp.maximum(acc + s2_ref[...], 0.0)

    # Lane-dense (H, W*Cout) stores, one per image in the group.
    for n in range(NB):
        o_ref[n] = y2[n * Hp:n * Hp + H].astype(o_ref.dtype)


def _pick_images_per_step(N, H, target_rows=256):
    """Images per grid step: fill the MXU M dim, keep >=2 blocks when N>=2."""
    nb = max(1, min(N, -(-target_rows // H)))
    if N >= 2:
        nb = min(nb, max(1, N // 2))   # >= 2 grid blocks (v7x: 2 TensorCores)
    while N % nb:                      # keep the grid exact
        nb -= 1
    return nb


def _weight_spec(shape, index_map, single_buffer):
    if single_buffer:
        try:
            # Constant-index weights: one resident buffer suffices (no re-DMA),
            # halving their VMEM footprint — matters for v7x's 64 MiB budget.
            return pl.BlockSpec(shape, index_map, pipeline_mode=pl.Buffered(1))
        except TypeError:              # jax build without pipeline_mode
            pass
    return pl.BlockSpec(shape, index_map)


def fused_conv_block(x_packed, band1, shift1, band2, shift2,
                     *, single_buffer_weights=True):
    N, H, WCin = x_packed.shape
    WC1 = band1.shape[-1]
    WC2 = band2.shape[-1]
    NB = _pick_images_per_step(N, H)
    Hp = H + 2
    kernel = functools.partial(_fused_conv_block_kernel, NB=NB, H=H)
    return pl.pallas_call(
        kernel,
        out_shape=jax.ShapeDtypeStruct((N, H, WC2), jnp.float32),
        grid_spec=pltpu.PrefetchScalarGridSpec(
            num_scalar_prefetch=0,
            grid=(N // NB,),
            in_specs=[
                pl.BlockSpec((NB, H, WCin), lambda n: (n, 0, 0)),
                _weight_spec(band1.shape, lambda n: (0, 0, 0),
                             single_buffer_weights),
                _weight_spec(shift1.shape, lambda n: (0, 0),
                             single_buffer_weights),
                _weight_spec(band2.shape, lambda n: (0, 0, 0),
                             single_buffer_weights),
                _weight_spec(shift2.shape, lambda n: (0, 0),
                             single_buffer_weights),
            ],
            out_specs=pl.BlockSpec((NB, H, WC2), lambda n: (n, 0, 0)),
            scratch_shapes=[
                pltpu.VMEM((NB * Hp, WCin), jnp.bfloat16),  # padded L1 input
                pltpu.VMEM((NB * Hp, WC1), jnp.bfloat16),   # padded L1 output
            ],
        ),
        compiler_params=pltpu.CompilerParams(
            dimension_semantics=("parallel",),
            vmem_limit_bytes=32 * 1024 * 1024),
    )(x_packed, band1, shift1, band2, shift2)


def _fold_and_pack(w_oihw, bias, bn_scale, bn_shift, W_img):
    """Fold conv bias + eval-mode BN into banded bf16 weights + f32 shift.

    Returns:
      bands: (3, W*Cin, W*Cout) bf16 so that a 3x3 SAME conv over an
             (H, W*Cin) packed slab equals sum_dy slab_padded[dy:dy+H] @ bands[dy].
      shift: (1, W*Cout) f32 — bias*scale + bn_shift, tiled across W.
    """
    Cout, Cin, KH, KW = w_oihw.shape
    w_hwio = jnp.transpose(w_oihw * bn_scale[:, None, None, None], (2, 3, 1, 0))
    q = jnp.arange(W_img * Cin)            # packed input lane index
    r = jnp.arange(W_img * Cout)           # packed output lane index
    wq, ci = q // Cin, q % Cin
    wr, co = r // Cout, r % Cout
    dx = wq[:, None] - wr[None, :] + 1     # kernel column tap (padding = 1)
    valid = (dx >= 0) & (dx < KW)
    dxc = jnp.clip(dx, 0, KW - 1)
    ci2 = jnp.broadcast_to(ci[:, None], dx.shape)
    co2 = jnp.broadcast_to(co[None, :], dx.shape)
    bands = w_hwio[:, dxc, ci2, co2]       # (KH, W*Cin, W*Cout)
    bands = jnp.where(valid[None], bands, 0.0).astype(jnp.bfloat16)
    shift = jnp.tile(bias * bn_scale + bn_shift, W_img)
    return bands, shift.reshape(1, W_img * Cout).astype(jnp.float32)


def prepare_conv_block_params(params, W_img):
    """One-time fold/pack of conv+BN params into banded weights (not per-step)."""
    (w1, b1, s1, t1), (w2, b2, s2, t2) = params
    band1, shift1 = _fold_and_pack(w1, b1, s1, t1, W_img)
    band2, shift2 = _fold_and_pack(w2, b2, s2, t2, W_img)
    return band1, shift1, band2, shift2


def conv_block_forward(x_nchw, packed_params, *, single_buffer_weights=True):
    band1, shift1, band2, shift2 = packed_params
    N, Cin, H, W = x_nchw.shape
    C2 = band2.shape[-1] // W
    # NCHW -> width-and-channel packed bf16 (N, H, W*Cin) slabs (lane-dense).
    # Callers keeping NHWC/packed activations across layers can skip this and
    # call fused_conv_block directly.
    x = jnp.transpose(x_nchw, (0, 2, 3, 1)).reshape(N, H, W * Cin)
    x = x.astype(jnp.bfloat16)
    y = fused_conv_block(x, band1, shift1, band2, shift2,
                         single_buffer_weights=single_buffer_weights)
    return jnp.transpose(y.reshape(N, H, W, C2), (0, 3, 1, 2))  # -> NCHW f32


def _fold_bn(gamma, beta, running_mean, running_var, eps=1e-5):
    scale = gamma / jnp.sqrt(running_var + eps)
    shift = beta - running_mean * scale
    return scale, shift


def init_params(key, in_ch, out_ch):
    ks = jax.random.split(key, 12)

    def conv_init(kw, kb, cin, cout):
        fan_in = cin * 9
        bound = 1.0 / jnp.sqrt(fan_in)
        w = jax.random.uniform(kw, (cout, cin, 3, 3), jnp.float32, -bound, bound)
        b = jax.random.uniform(kb, (cout,), jnp.float32, -bound, bound)
        return w, b

    def bn_init(kg, kbt, km, kv, c):
        gamma = jax.random.uniform(kg, (c,), jnp.float32, 0.5, 1.5)
        beta = jax.random.uniform(kbt, (c,), jnp.float32, -0.5, 0.5)
        mean = 0.1 * jax.random.normal(km, (c,), jnp.float32)
        var = jax.random.uniform(kv, (c,), jnp.float32, 0.5, 1.5)
        return _fold_bn(gamma, beta, mean, var)

    w1, b1 = conv_init(ks[0], ks[1], in_ch, out_ch)
    s1, t1 = bn_init(ks[2], ks[3], ks[4], ks[5], out_ch)
    w2, b2 = conv_init(ks[6], ks[7], out_ch, out_ch)
    s2, t2 = bn_init(ks[8], ks[9], ks[10], ks[11], out_ch)
    return (w1, b1, s1, t1), (w2, b2, s2, t2)


def _reference_forward(x_nchw, params):
    (w1, b1, s1, t1), (w2, b2, s2, t2) = params

    def layer(x, w, b, s, t):
        w_hwio = jnp.transpose(w, (2, 3, 1, 0))
        y = jax.lax.conv_general_dilated(
            x, w_hwio, (1, 1), "SAME",
            dimension_numbers=("NHWC", "HWIO", "NHWC"))
        y = y + b
        y = y * s + t
        return jnp.maximum(y, 0.0)

    x = jnp.transpose(x_nchw, (0, 2, 3, 1))
    y = layer(x, w1, b1, s1, t1)
    y = layer(y, w2, b2, s2, t2)
    return jnp.transpose(y, (0, 3, 1, 2))


if __name__ == "__main__":
    key = jax.random.PRNGKey(0)
    kx, kp = jax.random.split(key)

    in_ch, out_ch = 4, 8
    N, H, W = 2, 16, 16
    x = jax.random.normal(kx, (N, in_ch, H, W), jnp.float32)
    params = init_params(kp, in_ch, out_ch)

    packed = prepare_conv_block_params(params, W)   # one-time, outside the step
    fwd = jax.jit(conv_block_forward, static_argnames=("single_buffer_weights",))
    try:
        out = jax.block_until_ready(fwd(x, packed))
    except Exception:
        # Fallback for jax builds that reject single-buffered weight specs.
        out = jax.block_until_ready(fwd(x, packed, single_buffer_weights=False))

    ref = jax.block_until_ready(_reference_forward(x, params))
    assert out.shape == (N, out_ch, H, W)
    # bf16 MXU operands with f32 accumulation: tolerance loosened vs f32 ref.
    if not jnp.allclose(out, ref, atol=5e-2, rtol=5e-2):
        raise SystemExit("mismatch vs reference")

    print("KERNEL_OK")
</pallas_src>

<mosaic_0001>
module attributes {stable_mosaic.version = 11 : i64} {
  func.func @_fused_conv_block_kernel(%arg0: i32, %arg1: memref<1x16x64xbf16, #tpu.memory_space<vmem>>, %arg2: memref<3x64x128xbf16, #tpu.memory_space<vmem>>, %arg3: memref<1x128xf32, #tpu.memory_space<vmem>>, %arg4: memref<3x128x128xbf16, #tpu.memory_space<vmem>>, %arg5: memref<1x128xf32, #tpu.memory_space<vmem>>, %arg6: memref<1x16x128xf32, #tpu.memory_space<vmem>>, %arg7: memref<18x64xbf16, #tpu.memory_space<vmem>>, %arg8: memref<18x128xbf16, #tpu.memory_space<vmem>>) attributes {dimension_semantics = [#tpu.dimension_semantics<parallel>], iteration_bounds = array<i64: 2>, scalar_prefetch = 0 : i64, scratch_operands = 2 : i64, tpu.core_type = #tpu.core_type<tc>, window_params = [{transform_indices = @transform_0, window_bounds = array<i64: 1, 16, 64>}, {pipeline_mode = #tpu.pipeline_mode<synchronous>, transform_indices = @transform_1, window_bounds = array<i64: 3, 64, 128>}, {pipeline_mode = #tpu.pipeline_mode<synchronous>, transform_indices = @transform_2, window_bounds = array<i64: 1, 128>}, {pipeline_mode = #tpu.pipeline_mode<synchronous>, transform_indices = @transform_3, window_bounds = array<i64: 3, 128, 128>}, {pipeline_mode = #tpu.pipeline_mode<synchronous>, transform_indices = @transform_4, window_bounds = array<i64: 1, 128>}, {transform_indices = @transform_5, window_bounds = array<i64: 1, 16, 128>}]} {
    %cst = arith.constant 0.000000e+00 : bf16
    %0 = vector.broadcast %cst : bf16 to vector<1x64xbf16>
    %c0 = arith.constant 0 : index
    %c0_0 = arith.constant 0 : index
    %1 = vector.load %arg7[%c0, %c0_0] : memref<18x64xbf16, #tpu.memory_space<vmem>>, vector<1x64xbf16>
    tpu.vector_store %arg7[%c0, %c0_0], %0 {strides = array<i32>} : memref<18x64xbf16, #tpu.memory_space<vmem>>, vector<1x64xbf16>,
    %c17 = arith.constant 17 : index
    %c0_1 = arith.constant 0 : index
    %2 = vector.load %arg7[%c17, %c0_1] : memref<18x64xbf16, #tpu.memory_space<vmem>>, vector<1x64xbf16>
    tpu.vector_store %arg7[%c17, %c0_1], %0 {strides = array<i32>} : memref<18x64xbf16, #tpu.memory_space<vmem>>, vector<1x64xbf16>,
    %c0_2 = arith.constant 0 : index
    %c0_3 = arith.constant 0 : index
    %c0_4 = arith.constant 0 : index
    %3 = vector.load %arg1[%c0_2, %c0_3, %c0_4] : memref<1x16x64xbf16, #tpu.memory_space<vmem>>, vector<1x16x64xbf16>
    %4 = vector.shape_cast %3 : vector<1x16x64xbf16> to vector<16x64xbf16>
    %c1 = arith.constant 1 : index
    %c0_5 = arith.constant 0 : index
    %5 = vector.load %arg7[%c1, %c0_5] : memref<18x64xbf16, #tpu.memory_space<vmem>>, vector<16x64xbf16>
    tpu.vector_store %arg7[%c1, %c0_5], %4 {strides = array<i32>} : memref<18x64xbf16, #tpu.memory_space<vmem>>, vector<16x64xbf16>,
    %c0_6 = arith.constant 0 : index
    %c0_7 = arith.constant 0 : index
    %6 = vector.load %arg7[%c0_6, %c0_7] : memref<18x64xbf16, #tpu.memory_space<vmem>>, vector<16x64xbf16>
    %c0_8 = arith.constant 0 : index
    %c0_9 = arith.constant 0 : index
    %c0_10 = arith.constant 0 : index
    %7 = vector.load %arg2[%c0_8, %c0_9, %c0_10] : memref<3x64x128xbf16, #tpu.memory_space<vmem>>, vector<1x64x128xbf16>
    %8 = vector.shape_cast %7 : vector<1x64x128xbf16> to vector<64x128xbf16>
    %cst_11 = arith.constant dense<0.000000e+00> : vector<16x128xf32>
    %9 = tpu.matmul %6, %8, %cst_11 {dimension_numbers = #tpu.dot_dimension_numbers<[1], [0], [0], [1], [0, 0, 1, 1], [], []>} : vector<16x64xbf16>, vector<64x128xbf16>, vector<16x128xf32> -> vector<16x128xf32>
    %c1_12 = arith.constant 1 : index
    %c0_13 = arith.constant 0 : index
    %10 = vector.load %arg7[%c1_12, %c0_13] : memref<18x64xbf16, #tpu.memory_space<vmem>>, vector<16x64xbf16>
    %c1_14 = arith.constant 1 : index
    %c0_15 = arith.constant 0 : index
    %c0_16 = arith.constant 0 : index
    %11 = vector.load %arg2[%c1_14, %c0_15, %c0_16] : memref<3x64x128xbf16, #tpu.memory_space<vmem>>, vector<1x64x128xbf16>
    %12 = vector.shape_cast %11 : vector<1x64x128xbf16> to vector<64x128xbf16>
    %cst_17 = arith.constant dense<0.000000e+00> : vector<16x128xf32>
    %13 = tpu.matmul %10, %12, %cst_17 {dimension_numbers = #tpu.dot_dimension_numbers<[1], [0], [0], [1], [0, 0, 1, 1], [], []>} : vector<16x64xbf16>, vector<64x128xbf16>, vector<16x128xf32> -> vector<16x128xf32>
    %14 = arith.addf %9, %13 : vector<16x128xf32>
    %c2 = arith.constant 2 : index
    %c0_18 = arith.constant 0 : index
    %15 = vector.load %arg7[%c2, %c0_18] : memref<18x64xbf16, #tpu.memory_space<vmem>>, vector<16x64xbf16>
    %c2_19 = arith.constant 2 : index
    %c0_20 = arith.constant 0 : index
    %c0_21 = arith.constant 0 : index
    %16 = vector.load %arg2[%c2_19, %c0_20, %c0_21] : memref<3x64x128xbf16, #tpu.memory_space<vmem>>, vector<1x64x128xbf16>
    %17 = vector.shape_cast %16 : vector<1x64x128xbf16> to vector<64x128xbf16>
    %cst_22 = arith.constant dense<0.000000e+00> : vector<16x128xf32>
    %18 = tpu.matmul %15, %17, %cst_22 {dimension_numbers = #tpu.dot_dimension_numbers<[1], [0], [0], [1], [0, 0, 1, 1], [], []>} : vector<16x64xbf16>, vector<64x128xbf16>, vector<16x128xf32> -> vector<16x128xf32>
    %19 = arith.addf %14, %18 : vector<16x128xf32>
    %c0_23 = arith.constant 0 : index
    %c0_24 = arith.constant 0 : index
    %20 = vector.load %arg3[%c0_23, %c0_24] : memref<1x128xf32, #tpu.memory_space<vmem>>, vector<1x128xf32>
    %21 = vector.broadcast %20 : vector<1x128xf32> to vector<16x128xf32>
    %22 = arith.addf %19, %21 : vector<16x128xf32>
    %cst_25 = arith.constant 0.000000e+00 : f32
    %23 = vector.broadcast %cst_25 : f32 to vector<16x128xf32>
    %24 = arith.maximumf %22, %23 : vector<16x128xf32>
    %25 = arith.truncf %24 : vector<16x128xf32> to vector<16x128xbf16>
    %cst_26 = arith.constant 0.000000e+00 : bf16
    %26 = vector.broadcast %cst_26 : bf16 to vector<1x128xbf16>
    %c0_27 = arith.constant 0 : index
    %c0_28 = arith.constant 0 : index
    %27 = vector.load %arg8[%c0_27, %c0_28] : memref<18x128xbf16, #tpu.memory_space<vmem>>, vector<1x128xbf16>
    tpu.vector_store %arg8[%c0_27, %c0_28], %26 {strides = array<i32>} : memref<18x128xbf16, #tpu.memory_space<vmem>>, vector<1x128xbf16>,
    %c17_29 = arith.constant 17 : index
    %c0_30 = arith.constant 0 : index
    %28 = vector.load %arg8[%c17_29, %c0_30] : memref<18x128xbf16, #tpu.memory_space<vmem>>, vector<1x128xbf16>
    tpu.vector_store %arg8[%c17_29, %c0_30], %26 {strides = array<i32>} : memref<18x128xbf16, #tpu.memory_space<vmem>>, vector<1x128xbf16>,
    %c1_31 = arith.constant 1 : index
    %c0_32 = arith.constant 0 : index
    %29 = vector.load %arg8[%c1_31, %c0_32] : memref<18x128xbf16, #tpu.memory_space<vmem>>, vector<16x128xbf16>
    tpu.vector_store %arg8[%c1_31, %c0_32], %25 {strides = array<i32>} : memref<18x128xbf16, #tpu.memory_space<vmem>>, vector<16x128xbf16>,
    %c0_33 = arith.constant 0 : index
    %c0_34 = arith.constant 0 : index
    %30 = vector.load %arg8[%c0_33, %c0_34] : memref<18x128xbf16, #tpu.memory_space<vmem>>, vector<16x128xbf16>
    %c0_35 = arith.constant 0 : index
    %c0_36 = arith.constant 0 : index
    %c0_37 = arith.constant 0 : index
    %31 = vector.load %arg4[%c0_35, %c0_36, %c0_37] : memref<3x128x128xbf16, #tpu.memory_space<vmem>>, vector<1x128x128xbf16>
    %32 = vector.shape_cast %31 : vector<1x128x128xbf16> to vector<128x128xbf16>
    %cst_38 = arith.constant dense<0.000000e+00> : vector<16x128xf32>
    %33 = tpu.matmul %30, %32, %cst_38 {dimension_numbers = #tpu.dot_dimension_numbers<[1], [0], [0], [1], [0, 0, 1, 1], [], []>} : vector<16x128xbf16>, vector<128x128xbf16>, vector<16x128xf32> -> vector<16x128xf32>
    %c1_39 = arith.constant 1 : index
    %c0_40 = arith.constant 0 : index
    %34 = vector.load %arg8[%c1_39, %c0_40] : memref<18x128xbf16, #tpu.memory_space<vmem>>, vector<16x128xbf16>
    %c1_41 = arith.constant 1 : index
    %c0_42 = arith.constant 0 : index
    %c0_43 = arith.constant 0 : index
    %35 = vector.load %arg4[%c1_41, %c0_42, %c0_43] : memref<3x128x128xbf16, #tpu.memory_space<vmem>>, vector<1x128x128xbf16>
    %36 = vector.shape_cast %35 : vector<1x128x128xbf16> to vector<128x128xbf16>
    %cst_44 = arith.constant dense<0.000000e+00> : vector<16x128xf32>
    %37 = tpu.matmul %34, %36, %cst_44 {dimension_numbers = #tpu.dot_dimension_numbers<[1], [0], [0], [1], [0, 0, 1, 1], [], []>} : vector<16x128xbf16>, vector<128x128xbf16>, vector<16x128xf32> -> vector<16x128xf32>
    %38 = arith.addf %33, %37 : vector<16x128xf32>
    %c2_45 = arith.constant 2 : index
    %c0_46 = arith.constant 0 : index
    %39 = vector.load %arg8[%c2_45, %c0_46] : memref<18x128xbf16, #tpu.memory_space<vmem>>, vector<16x128xbf16>
    %c2_47 = arith.constant 2 : index
    %c0_48 = arith.constant 0 : index
    %c0_49 = arith.constant 0 : index
    %40 = vector.load %arg4[%c2_47, %c0_48, %c0_49] : memref<3x128x128xbf16, #tpu.memory_space<vmem>>, vector<1x128x128xbf16>
    %41 = vector.shape_cast %40 : vector<1x128x128xbf16> to vector<128x128xbf16>
    %cst_50 = arith.constant dense<0.000000e+00> : vector<16x128xf32>
    %42 = tpu.matmul %39, %41, %cst_50 {dimension_numbers = #tpu.dot_dimension_numbers<[1], [0], [0], [1], [0, 0, 1, 1], [], []>} : vector<16x128xbf16>, vector<128x128xbf16>, vector<16x128xf32> -> vector<16x128xf32>
    %43 = arith.addf %38, %42 : vector<16x128xf32>
    %c0_51 = arith.constant 0 : index
    %c0_52 = arith.constant 0 : index
    %44 = vector.load %arg5[%c0_51, %c0_52] : memref<1x128xf32, #tpu.memory_space<vmem>>, vector<1x128xf32>
    %45 = vector.broadcast %44 : vector<1x128xf32> to vector<16x128xf32>
    %46 = arith.addf %43, %45 : vector<16x128xf32>
    %cst_53 = arith.constant 0.000000e+00 : f32
    %47 = vector.broadcast %cst_53 : f32 to vector<16x128xf32>
    %48 = arith.maximumf %46, %47 : vector<16x128xf32>
    %c0_54 = arith.constant 0 : index
    %c0_55 = arith.constant 0 : index
    %c0_56 = arith.constant 0 : index
    %49 = vector.load %arg6[%c0_54, %c0_55, %c0_56] : memref<1x16x128xf32, #tpu.memory_space<vmem>>, vector<1x16x128xf32>
    %50 = vector.shape_cast %49 : vector<1x16x128xf32> to vector<16x128xf32>
    %51 = vector.shape_cast %48 : vector<16x128xf32> to vector<1x16x128xf32>
    tpu.vector_store %arg6[%c0_54, %c0_55, %c0_56], %51 {strides = array<i32>} : memref<1x16x128xf32, #tpu.memory_space<vmem>>, vector<1x16x128xf32>,
    return
  }
  func.func @transform_0(%arg0: i32) -> (i32, i32, i32) {
    %c0_i32 = arith.constant 0 : i32
    %c0_i32_0 = arith.constant 0 : i32
    %c0_i32_1 = arith.constant 0 : i32
    return %arg0, %c0_i32, %c0_i32_0 : i32, i32, i32
  }
  func.func @transform_1(%arg0: i32) -> (i32, i32, i32) {
    %c0_i32 = arith.constant 0 : i32
    %c0_i32_0 = arith.constant 0 : i32
    %c0_i32_1 = arith.constant 0 : i32
    %c0_i32_2 = arith.constant 0 : i32
    return %c0_i32, %c0_i32_0, %c0_i32_1 : i32, i32, i32
  }
  func.func @transform_2(%arg0: i32) -> (i32, i32) {
    %c0_i32 = arith.constant 0 : i32
    %c0_i32_0 = arith.constant 0 : i32
    %c0_i32_1 = arith.constant 0 : i32
    return %c0_i32, %c0_i32_0 : i32, i32
  }
  func.func @transform_3(%arg0: i32) -> (i32, i32, i32) {
    %c0_i32 = arith.constant 0 : i32
    %c0_i32_0 = arith.constant 0 : i32
    %c0_i32_1 = arith.constant 0 : i32
    %c0_i32_2 = arith.constant 0 : i32
    return %c0_i32, %c0_i32_0, %c0_i32_1 : i32, i32, i32
  }
  func.func @transform_4(%arg0: i32) -> (i32, i32) {
    %c0_i32 = arith.constant 0 : i32
    %c0_i32_0 = arith.constant 0 : i32
    %c0_i32_1 = arith.constant 0 : i32
    return %c0_i32, %c0_i32_0 : i32, i32
  }
  func.func @transform_5(%arg0: i32) -> (i32, i32, i32) {
    %c0_i32 = arith.constant 0 : i32
    %c0_i32_0 = arith.constant 0 : i32
    %c0_i32_1 = arith.constant 0 : i32
    return %arg0, %c0_i32, %c0_i32_0 : i32, i32, i32
  }
}

module attributes {stable_mosaic.version = 11 : i64} {
  func.func @_fused_conv_block_kernel(%arg0: i32, %arg1: memref<1x16x64xbf16, #tpu.memory_space<vmem>>, %arg2: memref<3x64x128xbf16, #tpu.memory_space<vmem>>, %arg3: memref<1x128xf32, #tpu.memory_space<vmem>>, %arg4: memref<3x128x128xbf16, #tpu.memory_space<vmem>>, %arg5: memref<1x128xf32, #tpu.memory_space<vmem>>, %arg6: memref<1x16x128xf32, #tpu.memory_space<vmem>>, %arg7: memref<18x64xbf16, #tpu.memory_space<vmem>>, %arg8: memref<18x128xbf16, #tpu.memory_space<vmem>>) attributes {dimension_semantics = [#tpu.dimension_semantics<parallel>], iteration_bounds = array<i64: 2>, scalar_prefetch = 0 : i64, scratch_operands = 2 : i64, tpu.core_type = #tpu.core_type<tc>, window_params = [{transform_indices = @transform_0, window_bounds = array<i64: 1, 16, 64>}, {pipeline_mode = #tpu.pipeline_mode<synchronous>, transform_indices = @transform_1, window_bounds = array<i64: 3, 64, 128>}, {pipeline_mode = #tpu.pipeline_mode<synchronous>, transform_indices = @transform_2, window_bounds = array<i64: 1, 128>}, {pipeline_mode = #tpu.pipeline_mode<synchronous>, transform_indices = @transform_3, window_bounds = array<i64: 3, 128, 128>}, {pipeline_mode = #tpu.pipeline_mode<synchronous>, transform_indices = @transform_4, window_bounds = array<i64: 1, 128>}, {transform_indices = @transform_5, window_bounds = array<i64: 1, 16, 128>}]} {
    %cst = arith.constant 0.000000e+00 : bf16
    %0 = vector.broadcast %cst : bf16 to vector<1x64xbf16>
    %c0 = arith.constant 0 : index
    %c0_0 = arith.constant 0 : index
    %1 = vector.load %arg7[%c0, %c0_0] : memref<18x64xbf16, #tpu.memory_space<vmem>>, vector<1x64xbf16>
    tpu.vector_store %arg7[%c0, %c0_0], %0 {strides = array<i32>} : memref<18x64xbf16, #tpu.memory_space<vmem>>, vector<1x64xbf16>,
    %c17 = arith.constant 17 : index
    %c0_1 = arith.constant 0 : index
    %2 = vector.load %arg7[%c17, %c0_1] : memref<18x64xbf16, #tpu.memory_space<vmem>>, vector<1x64xbf16>
    tpu.vector_store %arg7[%c17, %c0_1], %0 {strides = array<i32>} : memref<18x64xbf16, #tpu.memory_space<vmem>>, vector<1x64xbf16>,
    %c0_2 = arith.constant 0 : index
    %c0_3 = arith.constant 0 : index
    %c0_4 = arith.constant 0 : index
    %3 = vector.load %arg1[%c0_2, %c0_3, %c0_4] : memref<1x16x64xbf16, #tpu.memory_space<vmem>>, vector<1x16x64xbf16>
    %4 = vector.shape_cast %3 : vector<1x16x64xbf16> to vector<16x64xbf16>
    %c1 = arith.constant 1 : index
    %c0_5 = arith.constant 0 : index
    %5 = vector.load %arg7[%c1, %c0_5] : memref<18x64xbf16, #tpu.memory_space<vmem>>, vector<16x64xbf16>
    tpu.vector_store %arg7[%c1, %c0_5], %4 {strides = array<i32>} : memref<18x64xbf16, #tpu.memory_space<vmem>>, vector<16x64xbf16>,
    %c0_6 = arith.constant 0 : index
    %c0_7 = arith.constant 0 : index
    %6 = vector.load %arg7[%c0_6, %c0_7] : memref<18x64xbf16, #tpu.memory_space<vmem>>, vector<16x64xbf16>
    %c0_8 = arith.constant 0 : index
    %c0_9 = arith.constant 0 : index
    %c0_10 = arith.constant 0 : index
    %7 = vector.load %arg2[%c0_8, %c0_9, %c0_10] : memref<3x64x128xbf16, #tpu.memory_space<vmem>>, vector<1x64x128xbf16>
    %8 = vector.shape_cast %7 : vector<1x64x128xbf16> to vector<64x128xbf16>
    %cst_11 = arith.constant dense<0.000000e+00> : vector<16x128xf32>
    %9 = tpu.matmul %6, %8, %cst_11 {dimension_numbers = #tpu.dot_dimension_numbers<[1], [0], [0], [1], [0, 0, 1, 1], [], []>} : vector<16x64xbf16>, vector<64x128xbf16>, vector<16x128xf32> -> vector<16x128xf32>
    %c1_12 = arith.constant 1 : index
    %c0_13 = arith.constant 0 : index
    %10 = vector.load %arg7[%c1_12, %c0_13] : memref<18x64xbf16, #tpu.memory_space<vmem>>, vector<16x64xbf16>
    %c1_14 = arith.constant 1 : index
    %c0_15 = arith.constant 0 : index
    %c0_16 = arith.constant 0 : index
    %11 = vector.load %arg2[%c1_14, %c0_15, %c0_16] : memref<3x64x128xbf16, #tpu.memory_space<vmem>>, vector<1x64x128xbf16>
    %12 = vector.shape_cast %11 : vector<1x64x128xbf16> to vector<64x128xbf16>
    %cst_17 = arith.constant dense<0.000000e+00> : vector<16x128xf32>
    %13 = tpu.matmul %10, %12, %cst_17 {dimension_numbers = #tpu.dot_dimension_numbers<[1], [0], [0], [1], [0, 0, 1, 1], [], []>} : vector<16x64xbf16>, vector<64x128xbf16>, vector<16x128xf32> -> vector<16x128xf32>
    %14 = arith.addf %9, %13 : vector<16x128xf32>
    %c2 = arith.constant 2 : index
    %c0_18 = arith.constant 0 : index
    %15 = vector.load %arg7[%c2, %c0_18] : memref<18x64xbf16, #tpu.memory_space<vmem>>, vector<16x64xbf16>
    %c2_19 = arith.constant 2 : index
    %c0_20 = arith.constant 0 : index
    %c0_21 = arith.constant 0 : index
    %16 = vector.load %arg2[%c2_19, %c0_20, %c0_21] : memref<3x64x128xbf16, #tpu.memory_space<vmem>>, vector<1x64x128xbf16>
    %17 = vector.shape_cast %16 : vector<1x64x128xbf16> to vector<64x128xbf16>
    %cst_22 = arith.constant dense<0.000000e+00> : vector<16x128xf32>
    %18 = tpu.matmul %15, %17, %cst_22 {dimension_numbers = #tpu.dot_dimension_numbers<[1], [0], [0], [1], [0, 0, 1, 1], [], []>} : vector<16x64xbf16>, vector<64x128xbf16>, vector<16x128xf32> -> vector<16x128xf32>
    %19 = arith.addf %14, %18 : vector<16x128xf32>
    %c0_23 = arith.constant 0 : index
    %c0_24 = arith.constant 0 : index
    %20 = vector.load %arg3[%c0_23, %c0_24] : memref<1x128xf32, #tpu.memory_space<vmem>>, vector<1x128xf32>
    %21 = vector.broadcast %20 : vector<1x128xf32> to vector<16x128xf32>
    %22 = arith.addf %19, %21 : vector<16x128xf32>
    %cst_25 = arith.constant 0.000000e+00 : f32
    %23 = vector.broadcast %cst_25 : f32 to vector<16x128xf32>
    %24 = arith.maximumf %22, %23 : vector<16x128xf32>
    %25 = arith.truncf %24 : vector<16x128xf32> to vector<16x128xbf16>
    %cst_26 = arith.constant 0.000000e+00 : bf16
    %26 = vector.broadcast %cst_26 : bf16 to vector<1x128xbf16>
    %c0_27 = arith.constant 0 : index
    %c0_28 = arith.constant 0 : index
    %27 = vector.load %arg8[%c0_27, %c0_28] : memref<18x128xbf16, #tpu.memory_space<vmem>>, vector<1x128xbf16>
    tpu.vector_store %arg8[%c0_27, %c0_28], %26 {strides = array<i32>} : memref<18x128xbf16, #tpu.memory_space<vmem>>, vector<1x128xbf16>,
    %c17_29 = arith.constant 17 : index
    %c0_30 = arith.constant 0 : index
    %28 = vector.load %arg8[%c17_29, %c0_30] : memref<18x128xbf16, #tpu.memory_space<vmem>>, vector<1x128xbf16>
    tpu.vector_store %arg8[%c17_29, %c0_30], %26 {strides = array<i32>} : memref<18x128xbf16, #tpu.memory_space<vmem>>, vector<1x128xbf16>,
    %c1_31 = arith.constant 1 : index
    %c0_32 = arith.constant 0 : index
    %29 = vector.load %arg8[%c1_31, %c0_32] : memref<18x128xbf16, #tpu.memory_space<vmem>>, vector<16x128xbf16>
    tpu.vector_store %arg8[%c1_31, %c0_32], %25 {strides = array<i32>} : memref<18x128xbf16, #tpu.memory_space<vmem>>, vector<16x128xbf16>,
    %c0_33 = arith.constant 0 : index
    %c0_34 = arith.constant 0 : index
    %30 = vector.load %arg8[%c0_33, %c0_34] : memref<18x128xbf16, #tpu.memory_space<vmem>>, vector<16x128xbf16>
    %c0_35 = arith.constant 0 : index
    %c0_36 = arith.constant 0 : index
    %c0_37 = arith.constant 0 : index
    %31 = vector.load %arg4[%c0_35, %c0_36, %c0_37] : memref<3x128x128xbf16, #tpu.memory_space<vmem>>, vector<1x128x128xbf16>
    %32 = vector.shape_cast %31 : vector<1x128x128xbf16> to vector<128x128xbf16>
    %cst_38 = arith.constant dense<0.000000e+00> : vector<16x128xf32>
    %33 = tpu.matmul %30, %32, %cst_38 {dimension_numbers = #tpu.dot_dimension_numbers<[1], [0], [0], [1], [0, 0, 1, 1], [], []>} : vector<16x128xbf16>, vector<128x128xbf16>, vector<16x128xf32> -> vector<16x128xf32>
    %c1_39 = arith.constant 1 : index
    %c0_40 = arith.constant 0 : index
    %34 = vector.load %arg8[%c1_39, %c0_40] : memref<18x128xbf16, #tpu.memory_space<vmem>>, vector<16x128xbf16>
    %c1_41 = arith.constant 1 : index
    %c0_42 = arith.constant 0 : index
    %c0_43 = arith.constant 0 : index
    %35 = vector.load %arg4[%c1_41, %c0_42, %c0_43] : memref<3x128x128xbf16, #tpu.memory_space<vmem>>, vector<1x128x128xbf16>
    %36 = vector.shape_cast %35 : vector<1x128x128xbf16> to vector<128x128xbf16>
    %cst_44 = arith.constant dense<0.000000e+00> : vector<16x128xf32>
    %37 = tpu.matmul %34, %36, %cst_44 {dimension_numbers = #tpu.dot_dimension_numbers<[1], [0], [0], [1], [0, 0, 1, 1], [], []>} : vector<16x128xbf16>, vector<128x128xbf16>, vector<16x128xf32> -> vector<16x128xf32>
    %38 = arith.addf %33, %37 : vector<16x128xf32>
    %c2_45 = arith.constant 2 : index
    %c0_46 = arith.constant 0 : index
    %39 = vector.load %arg8[%c2_45, %c0_46] : memref<18x128xbf16, #tpu.memory_space<vmem>>, vector<16x128xbf16>
    %c2_47 = arith.constant 2 : index
    %c0_48 = arith.constant 0 : index
    %c0_49 = arith.constant 0 : index
    %40 = vector.load %arg4[%c2_47, %c0_48, %c0_49] : memref<3x128x128xbf16, #tpu.memory_space<vmem>>, vector<1x128x128xbf16>
    %41 = vector.shape_cast %40 : vector<1x128x128xbf16> to vector<128x128xbf16>
    %cst_50 = arith.constant dense<0.000000e+00> : vector<16x128xf32>
    %42 = tpu.matmul %39, %41, %cst_50 {dimension_numbers = #tpu.dot_dimension_numbers<[1], [0], [0], [1], [0, 0, 1, 1], [], []>} : vector<16x128xbf16>, vector<128x128xbf16>, vector<16x128xf32> -> vector<16x128xf32>
    %43 = arith.addf %38, %42 : vector<16x128xf32>
    %c0_51 = arith.constant 0 : index
    %c0_52 = arith.constant 0 : index
    %44 = vector.load %arg5[%c0_51, %c0_52] : memref<1x128xf32, #tpu.memory_space<vmem>>, vector<1x128xf32>
    %45 = vector.broadcast %44 : vector<1x128xf32> to vector<16x128xf32>
    %46 = arith.addf %43, %45 : vector<16x128xf32>
    %cst_53 = arith.constant 0.000000e+00 : f32
    %47 = vector.broadcast %cst_53 : f32 to vector<16x128xf32>
    %48 = arith.maximumf %46, %47 : vector<16x128xf32>
    %c0_54 = arith.constant 0 : index
    %c0_55 = arith.constant 0 : index
    %c0_56 = arith.constant 0 : index
    %49 = vector.load %arg6[%c0_54, %c0_55, %c0_56] : memref<1x16x128xf32, #tpu.memory_space<vmem>>, vector<1x16x128xf32>
    %50 = vector.shape_cast %49 : vector<1x16x128xf32> to vector<16x128xf32>
    %51 = vector.shape_cast %48 : vector<16x128xf32> to vector<1x16x128xf32>
    tpu.vector_store %arg6[%c0_54, %c0_55, %c0_56], %51 {strides = array<i32>} : memref<1x16x128xf32, #tpu.memory_space<vmem>>, vector<1x16x128xf32>,
    return
  }
  func.func @transform_0(%arg0: i32) -> (i32, i32, i32) {
    %c0_i32 = arith.constant 0 : i32
    %c0_i32_0 = arith.constant 0 : i32
    %c0_i32_1 = arith.constant 0 : i32
    return %arg0, %c0_i32, %c0_i32_0 : i32, i32, i32
  }
  func.func @transform_1(%arg0: i32) -> (i32, i32, i32) {
    %c0_i32 = arith.constant 0 : i32
    %c0_i32_0 = arith.constant 0 : i32
    %c0_i32_1 = arith.constant 0 : i32
    %c0_i32_2 = arith.constant 0 : i32
    return %c0_i32, %c0_i32_0, %c0_i32_1 : i32, i32, i32
  }
  func.func @transform_2(%arg0: i32) -> (i32, i32) {
    %c0_i32 = arith.constant 0 : i32
    %c0_i32_0 = arith.constant 0 : i32
    %c0_i32_1 = arith.constant 0 : i32
    return %c0_i32, %c0_i32_0 : i32, i32
  }
  func.func @transform_3(%arg0: i32) -> (i32, i32, i32) {
    %c0_i32 = arith.constant 0 : i32
    %c0_i32_0 = arith.constant 0 : i32
    %c0_i32_1 = arith.constant 0 : i32
    %c0_i32_2 = arith.constant 0 : i32
    return %c0_i32, %c0_i32_0, %c0_i32_1 : i32, i32, i32
  }
  func.func @transform_4(%arg0: i32) -> (i32, i32) {
    %c0_i32 = arith.constant 0 : i32
    %c0_i32_0 = arith.constant 0 : i32
    %c0_i32_1 = arith.constant 0 : i32
    return %c0_i32, %c0_i32_0 : i32, i32
  }
  func.func @transform_5(%arg0: i32) -> (i32, i32, i32) {
    %c0_i32 = arith.constant 0 : i32
    %c0_i32_0 = arith.constant 0 : i32
    %c0_i32_1 = arith.constant 0 : i32
    return %arg0, %c0_i32, %c0_i32_0 : i32, i32, i32
  }
}

</mosaic_0001>

<llo_original>
// kernel: conv_block_forward.1
$region0: #{conv_block_forward.1}
  #allocation0 [shape = 'u32[]', space=smem, size = 0x4, offset = 0x4, fixed_abs, tag = 'smem constant byte address 0x4 - core index']
  #allocation1 [shape = 'u32[144,128]{1,0:T(1,128)}', space=vmem, size = 0x12000, scoped, tag = 'internal scratch']
  #allocation2 [shape = 'bf16[18,64]{1,0:T(8,128)(2,1)}', space=vmem, size = 0x1800, scoped, tag = 'scratch operand']
  #allocation3 [shape = 'bf16[18,128]{1,0:T(8,128)(2,1)}', space=vmem, size = 0x1800, scoped, tag = 'scratch operand']
  %s0 = inlined_call_operand.vmem [shape: bf16[2,16,64], index: 0, kind: input, shape index: {}]
  %s1 = inlined_call_operand.vmem [shape: bf16[3,64,128], index: 1, kind: input, shape index: {}]
  %s2 = inlined_call_operand.vmem [shape: f32[1,128], index: 2, kind: input, shape index: {}]
  %s3 = inlined_call_operand.vmem [shape: bf16[3,128,128], index: 3, kind: input, shape index: {}]
  %s4 = inlined_call_operand.vmem [shape: f32[1,128], index: 4, kind: input, shape index: {}]
  %s5 = inlined_call_operand.vmem [shape: f32[2,16,128], index: 5, kind: output, shape index: {}]
  %s6 = sld [smem:[#allocation0]]
  $region53: #{conv_block_forward.1} parent=0
    _
  %s8 = ssub.s32 1, %s6
  %s9 = scalar_select 0, %s8, %s6
  loop: start=0, step=1, limit=4
  $region2: #{conv_block_forward.1} parent=0 // loop_pre_header
    _
  $region3: #{conv_block_forward.1} parent=0 // loop_header
    %s11 = sphi 0, %s15
    %p12 = scmp.ge.s32.totalorder %s11, 4
    %s21 = sphi 0, %s23
    %s24 = sphi 0, %s21
    %s25 = sphi 0, %s24
    %s41 = sphi 0, %s25
    %s45 = sphi 0, %s45
    %s47 = sphi 0, %s45
    %s48 = sphi 0, %s47
    %s62 = sphi 0, %s48
    %s66 = sphi 0, %s66
    %s68 = sphi 0, %s66
    %s69 = sphi 0, %s68
    %s83 = sphi 0, %s69
    %s87 = sphi 0, %s87
    %s89 = sphi 0, %s87
    %s90 = sphi 0, %s89
    %s104 = sphi 0, %s90
    %s108 = sphi 0, %s108
    %s110 = sphi 0, %s108
    %s111 = sphi 0, %s110
    %s125 = sphi 0, %s111
    %s131 = sphi 0, %s133
    %s134 = sphi 0, %s131
    %s135 = sphi 0, %s134
    %s151 = sphi 0, %s135
  $region4: #{conv_block_forward.1} parent=0 // loop_header_branch
    %14 = sbr.rel (%p12) target = $region8
  $region5: #{conv_block_forward.1} parent=0 // loop_body
    %s16 = ssub.s32 %s11, 1
    %s17 = ssub.s32 %s11, 2
    %s18 = sadd.s32 %s11, 1
    %s19 = ssub.s32 %s11, %s18
    %p20 = scmp.eq.s32.totalorder %s19, 0
    %s22 = sadd.s32 %s21, 1
    %s23 = scalar_select %p20, %s21, %s22
    %p26 = pneg %p20
    %p27 = scmp.eq.s32.totalorder %s11, 1
    %p28 = por %p26, %p27
    %p29 = scmp.ne.s32.totalorder %s21, %s24
    %p30 = scmp.eq.s32.totalorder %s11, 0
    %p31 = por %p29, %p30
    %p32 = scmp.ne.s32.totalorder %s21, %s24
    %p33 = scmp.eq.s32.totalorder %s16, 1
    %p34 = por %p32, %p33
    %p35 = scmp.ne.s32.totalorder %s24, %s25
    %p36 = scmp.eq.s32.totalorder %s16, 0
    %p37 = por %p35, %p36
    %p38 = scmp.ne.s32.totalorder %s24, %s25
    %p39 = scmp.eq.s32.totalorder %s17, 1
    %p40 = por %p38, %p39
    %p42 = scmp.ne.s32.totalorder %s25, %s41
    %p43 = scmp.eq.s32.totalorder %s17, 0
    %p44 = por %p42, %p43
    %s46 = sadd.s32 %s45, 1
    %p49 = scmp.eq.s32.totalorder %s11, 1
    %p50 = scmp.ne.s32.totalorder %s45, %s47
    %p51 = scmp.eq.s32.totalorder %s11, 0
    %p52 = por %p50, %p51
    %p53 = scmp.ne.s32.totalorder %s45, %s47
    %p54 = scmp.eq.s32.totalorder %s16, 1
    %p55 = por %p53, %p54
    %p56 = scmp.ne.s32.totalorder %s47, %s48
    %p57 = scmp.eq.s32.totalorder %s16, 0
    %p58 = por %p56, %p57
    %p59 = scmp.ne.s32.totalorder %s47, %s48
    %p60 = scmp.eq.s32.totalorder %s17, 1
    %p61 = por %p59, %p60
    %p63 = scmp.ne.s32.totalorder %s48, %s62
    %p64 = scmp.eq.s32.totalorder %s17, 0
    %p65 = por %p63, %p64
    %s67 = sadd.s32 %s66, 1
    %p70 = scmp.eq.s32.totalorder %s11, 1
    %p71 = scmp.ne.s32.totalorder %s66, %s68
    %p72 = scmp.eq.s32.totalorder %s11, 0
    %p73 = por %p71, %p72
    %p74 = scmp.ne.s32.totalorder %s66, %s68
    %p75 = scmp.eq.s32.totalorder %s16, 1
    %p76 = por %p74, %p75
    %p77 = scmp.ne.s32.totalorder %s68, %s69
    %p78 = scmp.eq.s32.totalorder %s16, 0
    %p79 = por %p77, %p78
    %p80 = scmp.ne.s32.totalorder %s68, %s69
    %p81 = scmp.eq.s32.totalorder %s17, 1
    %p82 = por %p80, %p81
    %p84 = scmp.ne.s32.totalorder %s69, %s83
    %p85 = scmp.eq.s32.totalorder %s17, 0
    %p86 = por %p84, %p85
    %s88 = sadd.s32 %s87, 1
    %p91 = scmp.eq.s32.totalorder %s11, 1
    %p92 = scmp.ne.s32.totalorder %s87, %s89
    %p93 = scmp.eq.s32.totalorder %s11, 0
    %p94 = por %p92, %p93
    %p95 = scmp.ne.s32.totalorder %s87, %s89
    %p96 = scmp.eq.s32.totalorder %s16, 1
    %p97 = por %p95, %p96
    %p98 = scmp.ne.s32.totalorder %s89, %s90
    %p99 = scmp.eq.s32.totalorder %s16, 0
    %p100 = por %p98, %p99
    %p101 = scmp.ne.s32.totalorder %s89, %s90
    %p102 = scmp.eq.s32.totalorder %s17, 1
    %p103 = por %p101, %p102
    %p105 = scmp.ne.s32.totalorder %s90, %s104
    %p106 = scmp.eq.s32.totalorder %s17, 0
    %p107 = por %p105, %p106
    %s109 = sadd.s32 %s108, 1
    %p112 = scmp.eq.s32.totalorder %s11, 1
    %p113 = scmp.ne.s32.totalorder %s108, %s110
    %p114 = scmp.eq.s32.totalorder %s11, 0
    %p115 = por %p113, %p114
    %p116 = scmp.ne.s32.totalorder %s108, %s110
    %p117 = scmp.eq.s32.totalorder %s16, 1
    %p118 = por %p116, %p117
    %p119 = scmp.ne.s32.totalorder %s110, %s111
    %p120 = scmp.eq.s32.totalorder %s16, 0
    %p121 = por %p119, %p120
    %p122 = scmp.ne.s32.totalorder %s110, %s111
    %p123 = scmp.eq.s32.totalorder %s17, 1
    %p124 = por %p122, %p123
    %p126 = scmp.ne.s32.totalorder %s111, %s125
    %p127 = scmp.eq.s32.totalorder %s17, 0
    %p128 = por %p126, %p127
    %s129 = ssub.s32 %s11, %s18
    %p130 = scmp.eq.s32.totalorder %s129, 0
    %s132 = sadd.s32 %s131, 1
    %s133 = scalar_select %p130, %s131, %s132
    %p136 = pneg %p130
    %p137 = scmp.eq.s32.totalorder %s11, 1
    %p138 = por %p136, %p137
    %p139 = scmp.ne.s32.totalorder %s131, %s134
    %p140 = scmp.eq.s32.totalorder %s11, 0
    %p141 = por %p139, %p140
    %p142 = scmp.ne.s32.totalorder %s131, %s134
    %p143 = scmp.eq.s32.totalorder %s16, 1
    %p144 = por %p142, %p143
    %p145 = scmp.ne.s32.totalorder %s134, %s135
    %p146 = scmp.eq.s32.totalorder %s16, 0
    %p147 = por %p145, %p146
    %p148 = scmp.ne.s32.totalorder %s134, %s135
    %p149 = scmp.eq.s32.totalorder %s17, 1
    %p150 = por %p148, %p149
    %p152 = scmp.ne.s32.totalorder %s135, %s151
    %p153 = scmp.eq.s32.totalorder %s17, 0
    %p154 = por %p152, %p153
    %p155 = scmp.le.s32.totalorder 1, %s11
    %p156 = scmp.lt.s32.totalorder %s11, 3
    %p157 = pnand %p155, %p156
    %p158 = pneg %p157
    // Predicated region
    $region9: #{conv_block_forward.1} parent=5 // pred_check
      _
    $region10: #{conv_block_forward.1} parent=5 // pred_check_branch
      %160 = sbr.rel (%p157) target = $region12
    $region11: #{conv_block_forward.1} parent=5 // pred_region
      %s161 = ssub.s32 %s11, 1
      // Predicated region
      $region13: #{conv_block_forward.1} parent=11 // pred_check
        %p162 = pneg %p58
      $region14: #{conv_block_forward.1} parent=11 // pred_check_branch
        %164 = sbr.rel (%p162) target = $region16
      $region15: #{conv_block_forward.1} parent=11 // pred_region
        _
      $region16: #{conv_block_forward.1} parent=11 // pred_fallthru
        _
      // Predicated region
      $region17: #{conv_block_forward.1} parent=11 // pred_check
        %p165 = pneg %p79
      $region18: #{conv_block_forward.1} parent=11 // pred_check_branch
        %167 = sbr.rel (%p165) target = $region20
      $region19: #{conv_block_forward.1} parent=11 // pred_region
        _
      $region20: #{conv_block_forward.1} parent=11 // pred_fallthru
        _
      // Predicated region
      $region21: #{conv_block_forward.1} parent=11 // pred_check
        %p168 = pneg %p100
      $region22: #{conv_block_forward.1} parent=11 // pred_check_branch
        %170 = sbr.rel (%p168) target = $region24
      $region23: #{conv_block_forward.1} parent=11 // pred_region
        _
      $region24: #{conv_block_forward.1} parent=11 // pred_fallthru
        _
      // Predicated region
      $region25: #{conv_block_forward.1} parent=11 // pred_check
        %p171 = pneg %p121
      $region26: #{conv_block_forward.1} parent=11 // pred_check_branch
        %173 = sbr.rel (%p171) target = $region28
      $region27: #{conv_block_forward.1} parent=11 // pred_region
        _
      $region28: #{conv_block_forward.1} parent=11 // pred_fallthru
        _
    $region12: #{conv_block_forward.1} parent=5 // pred_fallthru
      _
    %p174 = scmp.lt.s32.totalorder %s11, 2
    // Predicated region
    $region29: #{conv_block_forward.1} parent=5 // pred_check
      %p175 = pneg %p174
    $region30: #{conv_block_forward.1} parent=5 // pred_check_branch
      %177 = sbr.rel (%p175) target = $region32
    $region31: #{conv_block_forward.1} parent=5 // pred_region
      // Predicated region
      $region33: #{conv_block_forward.1} parent=31 // pred_check
        %p178 = pneg %p31
      $region34: #{conv_block_forward.1} parent=31 // pred_check_branch
        %180 = sbr.rel (%p178) target = $region36
      $region35: #{conv_block_forward.1} parent=31 // pred_region
        %p181 = scmp.lt.s32.totalorder %s11, 1
        %s182 = scalar_select %p181, %s11, 1
        %s183 = smul.addr %s182, 2
        %s184 = smul.addr %s183, 4
        %s185 = scalar_lea.vmem %s0, %s184
      $region36: #{conv_block_forward.1} parent=31 // pred_fallthru
        _
    $region32: #{conv_block_forward.1} parent=5 // pred_fallthru
      _
    %p186 = scmp.le.s32.totalorder 1, %s11
    %p187 = scmp.lt.s32.totalorder %s11, 3
    %p188 = pnand %p186, %p187
    %p189 = pneg %p188
    // Predicated region
    $region37: #{conv_block_forward.1} parent=5 // pred_check
      _
    $region38: #{conv_block_forward.1} parent=5 // pred_check_branch
      %191 = sbr.rel (%p188) target = $region40
    $region39: #{conv_block_forward.1} parent=5 // pred_region
      %s192 = ssub.s32 %s11, 1
      %p193 = scmp.lt.s32.totalorder %s16, 1
      %s194 = scalar_select %p193, %s16, 1
      %s195 = smul.addr %s194, 2
      %s196 = smul.addr %s195, 4
      %s197 = scalar_lea.vmem %s0, %s196
      %p198 = pneg %p37
      %p199 = pneg %p34
      %p200 = pneg %p58
      %p201 = pneg %p55
      %p202 = pneg %p79
      %p203 = pneg %p76
      %p204 = pneg %p100
      %p205 = pneg %p97
      %p206 = pneg %p121
      %p207 = pneg %p118
      %p208 = pneg %p147
      %p209 = pneg %p144
      %p210 = scmp.lt.s32.totalorder %s16, 1
      %s211 = scalar_select %p210, %s16, 1
      %s212 = smul.addr %s211, 2
      %s213 = smul.addr %s212, 8
      %s214 = scalar_lea.vmem %s5, %s213
      %p215 = scmp.lt.s32.totalorder %s16, 1
      %s216 = scalar_select %p215, %s16, 1
      %s217 = smul.addr %s216, 2
      %s218 = smul.addr %s217, 4
      %s219 = scalar_lea.vmem %s0, %s218
      %p220 = scmp.lt.s32.totalorder %s16, 1
      %s221 = scalar_select %p220, %s16, 1
      %s222 = smul.addr %s221, 2
      %s223 = smul.addr %s222, 8
      %s224 = scalar_lea.vmem %s5, %s223
      %vm226 = vcmask 516096
      %vm227 = vsmask.f32 256
      %vm228 = vmand %vm226, %vm227
      %v229 = vld [vmem:[#allocation2] sm:$0x1]
      %v230 = vsel %vm228, 0, %v229
      %231 = vst [vmem:[#allocation2] sm:$0x1] %v230
      %vm232 = vsmask.f32 7938
      %vm233 = vmand %vm226, %vm232
      %v234 = vld [vmem:[#allocation2 + $0x8] sm:$0x1]
      %v235 = vsel %vm233, 0, %v234
      %236 = vst [vmem:[#allocation2 + $0x8] sm:$0x1] %v235
      %v237 = vld [vmem:[%s219] sm:$0xf]
      %v238 = vld [vmem:[%s219 + $0x4] sm:$0xf]
      %vm239 = vsmask.f32 4368
      %vm240 = vmor %vm227, %vm239
      %v242 = vshrl.u32 %v237, 16
      %v244 = vrot.slane %v242, 7
      %v245 = vshll.u32 %v237, 16
      %v247 = vor.u32 %v244, %v245
      %v248 = vrot.slane %v244, 4
      %v250 = vshrl.u32 %v238, 16
      %v252 = vrot.slane %v250, 7
      %v253 = vshll.u32 %v238, 16
      %v255 = vor.u32 %v252, %v253
      %v256 = vsel %vm240, %v248, %v255
      %v257 = vrot.slane %v252, 4
      %vm261 = vcmask 519168
      %vm262 = vmand %vm261, %vm232
      %v263 = vld [vmem:[#allocation2] sm:$0xf]
      %v264 = vsel %vm262, %v247, %v263
      %265 = vst [vmem:[#allocation2] sm:$0xf] %v264
      %vm266 = vcmask 519168
      %267 = vst.msk [vmem:[#allocation2 + $0x4] sm:$0xf] %vm266, %v256
      %v268 = vld [vmem:[#allocation2 + $0x8] sm:$0x1]
      %v269 = vsel %vm228, %v257, %v268
      %270 = vst [vmem:[#allocation2 + $0x8] sm:$0x1] %v269
      %v271 = vld [vmem:[#allocation2] sm:$0xf]
      %v272 = vld [vmem:[#allocation2 + $0x4] sm:$0xf]
      %v273 = vld [vmem:[%s1] sm:$0xf]
      %v274 = vld [vmem:[%s1 + $0x4] sm:$0xf]
      %v275 = vld [vmem:[%s1 + $0x8] sm:$0xf]
      %v276 = vld [vmem:[%s1 + $0xc] sm:$0xf]
      %v277 = vld [vmem:[%s1 + $0x10] sm:$0xf]
      %v278 = vld [vmem:[%s1 + $0x14] sm:$0xf]
      %v279 = vld [vmem:[%s1 + $0x18] sm:$0xf]
      %v280 = vld [vmem:[%s1 + $0x1c] sm:$0xf]
      %v281 = vld [vmem:[#allocation2 + $0x8] sm:$0x1]
      %s282 = scalar_lea.vmem %s1, 32
      %v283 = vld [vmem:[%s282] sm:$0xf]
      %v284 = vld [vmem:[%s282 + $0x4] sm:$0xf]
      %v285 = vld [vmem:[%s282 + $0x8] sm:$0xf]
      %v286 = vld [vmem:[%s282 + $0xc] sm:$0xf]
      %v287 = vld [vmem:[%s282 + $0x10] sm:$0xf]
      %v288 = vld [vmem:[%s282 + $0x14] sm:$0xf]
      %v289 = vld [vmem:[%s282 + $0x18] sm:$0xf]
      %v290 = vld [vmem:[%s282 + $0x1c] sm:$0xf]
      %v294 = vunpack.c.l.b16 %v271
      %v295 = vunpack.c.l.b16 %v272
      %v296 = vunpack.c.l.b16 %v281
      %v297 = vpack.c.b16 %v295, %v294
      %v298 = vpack.c.b16 %v296, %v296
      %vm299 = vsmask.f32 7424
      %v301 = vshrl.u32 %v297, 16
      %v303 = vshll.u32 %v297, 16
      %v305 = vrot.slane %v303, 1
      %v306 = vor.u32 %v301, %v305
      %v308 = vshll.u32 %v298, 16
      %v310 = vrot.slane %v308, 1
      %v311 = vsel %vm299, %v306, %v310
      %v320 = vunpack.c.l.b16 %v283
      %v321 = vunpack.c.l.b16 %v284
      %v322 = vunpack.c.l.b16 %v285
      %v323 = vunpack.c.l.b16 %v286
      %v324 = vunpack.c.l.b16 %v287
      %v325 = vunpack.c.l.b16 %v288
      %v326 = vunpack.c.l.b16 %v289
      %v327 = vunpack.c.l.b16 %v290
      %v328 = vpack.c.b16 %v321, %v320
      %v329 = vpack.c.b16 %v323, %v322
      %v330 = vpack.c.b16 %v325, %v324
      %v331 = vpack.c.b16 %v327, %v326
      %vm336 = vcmask 523264
      %v338 = vsel %vm336, %v311, 0
      %340 = vmatprep.subr.bf16.mxu0 0
      %341 = vmatpush1.bf16.msra.mxu0 %v328
      %342 = vmatprep.subr.bf16.mxu0 0
      %343 = vmatpush1.bf16.msra.mxu0 %v329
      %344 = vmatprep.subr.bf16.mxu0 0
      %345 = vmatpush1.bf16.msra.mxu0 %v330
      %346 = vmatprep.subr.bf16.mxu0 0
      %347 = vmatpush1.bf16.msra.mxu0 %v331
      %348 = vmatprep.subr.bf16.mxu0 0
      %349 = vmatpush1.bf16.msra.mxu0 0
      %350 = vmatprep.subr.bf16.mxu0 0
      %351 = vmatpush1.bf16.msra.mxu0 0
      %352 = vmatprep.subr.bf16.mxu0 0
      %353 = vmatpush1.bf16.msra.mxu0 0
      %354 = vmatprep.subr.bf16.mxu0 0
      %355 = vmatpush1.bf16.msra.mxu0 0
      %356 = vmatprep.subr.bf16.mxu0 0
      %357 = vmatpush1.bf16.msra.mxu0 0
      %358 = vmatprep.subr.bf16.mxu0 0
      %359 = vmatpush1.bf16.msra.mxu0 0
      %360 = vmatprep.subr.bf16.mxu0 0
      %361 = vmatpush1.bf16.msra.mxu0 0
      %362 = vmatprep.subr.bf16.mxu0 0
      %363 = vmatpush1.bf16.msra.mxu0 0
      %364 = vmatprep.subr.bf16.mxu0 0
      %365 = vmatpush1.bf16.msra.mxu0 0
      %366 = vmatprep.subr.bf16.mxu0 0
      %367 = vmatpush1.bf16.msra.mxu0 0
      %368 = vmatprep.subr.bf16.mxu0 0
      %369 = vmatpush1.bf16.msra.mxu0 0
      %370 = vmatprep.subr.bf16.mxu0 0
      %371 = vmatpush1.bf16.msra.mxu0 0
      %372 = vmatprep.mubr.bf16.mxu0 0
      %373 = vmatmul.mubr.bf16.gmra.mrb[0].mxu0 %v338
      %v374 = vpop.f32.mrb[0].mxu0
      %v375 = vadd.f32 0.0, %v374
      %v376 = vpop.f32.mrb[0].mxu0
      %v377 = vpop.f32.mrb[0].mxu0
      %v378 = vadd.f32 0.0, %v377
      %v379 = vpop.f32.mrb[0].mxu0
      %380 = vdwg.mxu0
      %v389 = vunpack.c.l.b16 %v273
      %v390 = vunpack.c.l.b16 %v274
      %v391 = vunpack.c.l.b16 %v275
      %v392 = vunpack.c.l.b16 %v276
      %v393 = vunpack.c.l.b16 %v277
      %v394 = vunpack.c.l.b16 %v278
      %v395 = vunpack.c.l.b16 %v279
      %v396 = vunpack.c.l.b16 %v280
      %v397 = vpack.c.b16 %v390, %v389
      %v398 = vpack.c.b16 %v392, %v391
      %v399 = vpack.c.b16 %v394, %v393
      %v400 = vpack.c.b16 %v396, %v395
      %v405 = vsel %vm336, %v297, 0
      %407 = vmatprep.subr.bf16.mxu0 0
      %408 = vmatpush1.bf16.msra.mxu0 %v397
      %409 = vmatprep.subr.bf16.mxu0 0
      %410 = vmatpush1.bf16.msra.mxu0 %v398
      %411 = vmatprep.subr.bf16.mxu0 0
      %412 = vmatpush1.bf16.msra.mxu0 %v399
      %413 = vmatprep.subr.bf16.mxu0 0
      %414 = vmatpush1.bf16.msra.mxu0 %v400
      %415 = vmatprep.subr.bf16.mxu0 0
      %416 = vmatpush1.bf16.msra.mxu0 0
      %417 = vmatprep.subr.bf16.mxu0 0
      %418 = vmatpush1.bf16.msra.mxu0 0
      %419 = vmatprep.subr.bf16.mxu0 0
      %420 = vmatpush1.bf16.msra.mxu0 0
      %421 = vmatprep.subr.bf16.mxu0 0
      %422 = vmatpush1.bf16.msra.mxu0 0
      %423 = vmatprep.subr.bf16.mxu0 0
      %424 = vmatpush1.bf16.msra.mxu0 0
      %425 = vmatprep.subr.bf16.mxu0 0
      %426 = vmatpush1.bf16.msra.mxu0 0
      %427 = vmatprep.subr.bf16.mxu0 0
      %428 = vmatpush1.bf16.msra.mxu0 0
      %429 = vmatprep.subr.bf16.mxu0 0
      %430 = vmatpush1.bf16.msra.mxu0 0
      %431 = vmatprep.subr.bf16.mxu0 0
      %432 = vmatpush1.bf16.msra.mxu0 0
      %433 = vmatprep.subr.bf16.mxu0 0
      %434 = vmatpush1.bf16.msra.mxu0 0
      %435 = vmatprep.subr.bf16.mxu0 0
      %436 = vmatpush1.bf16.msra.mxu0 0
      %437 = vmatprep.subr.bf16.mxu0 0
      %438 = vmatpush1.bf16.msra.mxu0 0
      %439 = vmatprep.mubr.bf16.mxu0 0
      %440 = vmatmul.mubr.bf16.gmra.mrb[0].mxu0 %v405
      %v441 = vpop.f32.mrb[0].mxu0
      %v442 = vadd.f32 %v375, %v441
      %v443 = vpop.f32.mrb[0].mxu0
      %v444 = vpop.f32.mrb[0].mxu0
      %v445 = vadd.f32 %v378, %v444
      %v446 = vpop.f32.mrb[0].mxu0
      %447 = vdwg.mxu0
      %v448 = vld [vmem:[#allocation2] sm:$0xe]
      %s449 = scalar_lea.vmem %s1, 64
      %v450 = vld [vmem:[%s449] sm:$0xf]
      %v451 = vld [vmem:[%s449 + $0x4] sm:$0xf]
      %v452 = vld [vmem:[%s449 + $0x8] sm:$0xf]
      %v453 = vld [vmem:[%s449 + $0xc] sm:$0xf]
      %v454 = vld [vmem:[%s449 + $0x10] sm:$0xf]
      %v455 = vld [vmem:[%s449 + $0x14] sm:$0xf]
      %v456 = vld [vmem:[%s449 + $0x18] sm:$0xf]
      %v457 = vld [vmem:[%s449 + $0x1c] sm:$0xf]
      %v459 = vunpack.c.l.b16 %v448
      %v460 = vpack.c.b16 %v295, %v459
      %vm461 = vcmask 1046528
      %v462 = vrot.slane %v460, 1
      %v463 = vrot.slane %v298, 1
      %v464 = vsel %vm461, %v462, %v463
      %v473 = vunpack.c.l.b16 %v450
      %v474 = vunpack.c.l.b16 %v451
      %v475 = vunpack.c.l.b16 %v452
      %v476 = vunpack.c.l.b16 %v453
      %v477 = vunpack.c.l.b16 %v454
      %v478 = vunpack.c.l.b16 %v455
      %v479 = vunpack.c.l.b16 %v456
      %v480 = vunpack.c.l.b16 %v457
      %v481 = vpack.c.b16 %v474, %v473
      %v482 = vpack.c.b16 %v476, %v475
      %v483 = vpack.c.b16 %v478, %v477
      %v484 = vpack.c.b16 %v480, %v479
      %v490 = vsel %vm336, %v464, 0
      %492 = vmatprep.subr.bf16.mxu0 0
      %493 = vmatpush1.bf16.msra.mxu0 %v481
      %494 = vmatprep.subr.bf16.mxu0 0
      %495 = vmatpush1.bf16.msra.mxu0 %v482
      %496 = vmatprep.subr.bf16.mxu0 0
      %497 = vmatpush1.bf16.msra.mxu0 %v483
      %498 = vmatprep.subr.bf16.mxu0 0
      %499 = vmatpush1.bf16.msra.mxu0 %v484
      %500 = vmatprep.subr.bf16.mxu0 0
      %501 = vmatpush1.bf16.msra.mxu0 0
      %502 = vmatprep.subr.bf16.mxu0 0
      %503 = vmatpush1.bf16.msra.mxu0 0
      %504 = vmatprep.subr.bf16.mxu0 0
      %505 = vmatpush1.bf16.msra.mxu0 0
      %506 = vmatprep.subr.bf16.mxu0 0
      %507 = vmatpush1.bf16.msra.mxu0 0
      %508 = vmatprep.subr.bf16.mxu0 0
      %509 = vmatpush1.bf16.msra.mxu0 0
      %510 = vmatprep.subr.bf16.mxu0 0
      %511 = vmatpush1.bf16.msra.mxu0 0
      %512 = vmatprep.subr.bf16.mxu0 0
      %513 = vmatpush1.bf16.msra.mxu0 0
      %514 = vmatprep.subr.bf16.mxu0 0
      %515 = vmatpush1.bf16.msra.mxu0 0
      %516 = vmatprep.subr.bf16.mxu0 0
      %517 = vmatpush1.bf16.msra.mxu0 0
      %518 = vmatprep.subr.bf16.mxu0 0
      %519 = vmatpush1.bf16.msra.mxu0 0
      %520 = vmatprep.subr.bf16.mxu0 0
      %521 = vmatpush1.bf16.msra.mxu0 0
      %522 = vmatprep.subr.bf16.mxu0 0
      %523 = vmatpush1.bf16.msra.mxu0 0
      %524 = vmatprep.mubr.bf16.mxu0 0
      %525 = vmatmul.mubr.bf16.gmra.mrb[0].mxu0 %v490
      %v526 = vpop.f32.mrb[0].mxu0
      %v527 = vadd.f32 0.0, %v526
      %v528 = vpop.f32.mrb[0].mxu0
      %v529 = vpop.f32.mrb[0].mxu0
      %v530 = vadd.f32 0.0, %v529
      %v531 = vpop.f32.mrb[0].mxu0
      %532 = vdwg.mxu0
      %v533 = vadd.f32 %v442, %v527
      %v534 = vadd.f32 %v445, %v530
      %v535 = vld [vmem:[%s2] sm:$0x1]
      %v537 = vlaneseq
      %v538 = vshrl.u32 %v537, 7
      %v539 = vsub.s32 0, %v538
      %v540 = vrot.slane %v535, %v539
      %v542 = vadd.f32 %v533, %v540
      %v543 = vadd.f32 %v534, %v540
      %v544 = vmax.f32 %v542, 0.0
      %v545 = vmax.f32 %v543, 0.0
      %v546 = vpack.c.bf16 %v545, %v544
      %vm547 = vcmask 1040384
      %vm548 = vmand %vm547, %vm227
      %v549 = vld [vmem:[#allocation3] sm:$0x1]
      %v550 = vsel %vm548, 0, %v549
      %551 = vst [vmem:[#allocation3] sm:$0x1] %v550
      %vm552 = vmand %vm547, %vm232
      %v553 = vld [vmem:[#allocation3 + $0x8] sm:$0x1]
      %v554 = vsel %vm552, 0, %v553
      %555 = vst [vmem:[#allocation3 + $0x8] sm:$0x1] %v554
      %v557 = vunpack.c.l.b16 %v546
      %v558 = vunpack.c.h.b16 %v546
      %v559 = vpack.c.b16 %v557, %v557
      %v560 = vpack.c.b16 %v558, %v558
      %v562 = vshrl.u32 %v559, 16
      %v564 = vrot.slane %v562, 7
      %v565 = vshll.u32 %v559, 16
      %v567 = vor.u32 %v564, %v565
      %v568 = vrot.slane %v564, 4
      %v570 = vshrl.u32 %v560, 16
      %v572 = vrot.slane %v570, 7
      %v573 = vshll.u32 %v560, 16
      %v575 = vor.u32 %v572, %v573
      %v576 = vsel %vm240, %v568, %v575
      %v577 = vrot.slane %v572, 4
      %vm581 = vcmask 1043456
      %vm582 = vmand %vm581, %vm232
      %v583 = vld [vmem:[#allocation3] sm:$0xf]
      %v584 = vsel %vm582, %v567, %v583
      %585 = vst [vmem:[#allocation3] sm:$0xf] %v584
      %586 = vst [vmem:[#allocation3 + $0x4] sm:$0xf] %v576
      %v587 = vld [vmem:[#allocation3 + $0x8] sm:$0x1]
      %v588 = vsel %vm548, %v577, %v587
      %589 = vst [vmem:[#allocation3 + $0x8] sm:$0x1] %v588
      %v590 = vld [vmem:[#allocation3] sm:$0xf]
      %v591 = vld [vmem:[#allocation3 + $0x4] sm:$0xf]
      %v592 = vld [vmem:[%s3] sm:$0xf]
      %v593 = vld [vmem:[%s3 + $0x4] sm:$0xf]
      %v594 = vld [vmem:[%s3 + $0x8] sm:$0xf]
      %v595 = vld [vmem:[%s3 + $0xc] sm:$0xf]
      %v596 = vld [vmem:[%s3 + $0x10] sm:$0xf]
      %v597 = vld [vmem:[%s3 + $0x14] sm:$0xf]
      %v598 = vld [vmem:[%s3 + $0x18] sm:$0xf]
      %v599 = vld [vmem:[%s3 + $0x1c] sm:$0xf]
      %v600 = vld [vmem:[%s3 + $0x20] sm:$0xf]
      %v601 = vld [vmem:[%s3 + $0x24] sm:$0xf]
      %v602 = vld [vmem:[%s3 + $0x28] sm:$0xf]
      %v603 = vld [vmem:[%s3 + $0x2c] sm:$0xf]
      %v604 = vld [vmem:[%s3 + $0x30] sm:$0xf]
      %v605 = vld [vmem:[%s3 + $0x34] sm:$0xf]
      %v606 = vld [vmem:[%s3 + $0x38] sm:$0xf]
      %v607 = vld [vmem:[%s3 + $0x3c] sm:$0xf]
      %v608 = vld [vmem:[#allocation3 + $0x8] sm:$0x1]
      %s609 = scalar_lea.vmem %s3, 64
      %v610 = vld [vmem:[%s609] sm:$0xf]
      %v611 = vld [vmem:[%s609 + $0x4] sm:$0xf]
      %v612 = vld [vmem:[%s609 + $0x8] sm:$0xf]
      %v613 = vld [vmem:[%s609 + $0xc] sm:$0xf]
      %v614 = vld [vmem:[%s609 + $0x10] sm:$0xf]
      %v615 = vld [vmem:[%s609 + $0x14] sm:$0xf]
      %v616 = vld [vmem:[%s609 + $0x18] sm:$0xf]
      %v617 = vld [vmem:[%s609 + $0x1c] sm:$0xf]
      %v618 = vld [vmem:[%s609 + $0x20] sm:$0xf]
      %v619 = vld [vmem:[%s609 + $0x24] sm:$0xf]
      %v620 = vld [vmem:[%s609 + $0x28] sm:$0xf]
      %v621 = vld [vmem:[%s609 + $0x2c] sm:$0xf]
      %v622 = vld [vmem:[%s609 + $0x30] sm:$0xf]
      %v623 = vld [vmem:[%s609 + $0x34] sm:$0xf]
      %v624 = vld [vmem:[%s609 + $0x38] sm:$0xf]
      %v625 = vld [vmem:[%s609 + $0x3c] sm:$0xf]
      %v629 = vunpack.c.l.b16 %v590
      %v630 = vunpack.c.l.b16 %v591
      %v631 = vunpack.c.l.b16 %v608
      %v632 = vpack.c.b16 %v630, %v629
      %v633 = vpack.c.b16 %v631, %v631
      %v635 = vshrl.u32 %v632, 16
      %v637 = vshll.u32 %v632, 16
      %v639 = vrot.slane %v637, 1
      %v640 = vor.u32 %v635, %v639
      %v642 = vshll.u32 %v633, 16
      %v644 = vrot.slane %v642, 1
      %v645 = vsel %vm299, %v640, %v644
      %v663 = vunpack.c.l.b16 %v610
      %v664 = vunpack.c.l.b16 %v611
      %v665 = vunpack.c.l.b16 %v612
      %v666 = vunpack.c.l.b16 %v613
      %v667 = vunpack.c.l.b16 %v614
      %v668 = vunpack.c.l.b16 %v615
      %v669 = vunpack.c.l.b16 %v616
      %v670 = vunpack.c.l.b16 %v617
      %v671 = vunpack.c.l.b16 %v618
      %v672 = vunpack.c.l.b16 %v619
      %v673 = vunpack.c.l.b16 %v620
      %v674 = vunpack.c.l.b16 %v621
      %v675 = vunpack.c.l.b16 %v622
      %v676 = vunpack.c.l.b16 %v623
      %v677 = vunpack.c.l.b16 %v624
      %v678 = vunpack.c.l.b16 %v625
      %v679 = vpack.c.b16 %v664, %v663
      %v680 = vpack.c.b16 %v666, %v665
      %v681 = vpack.c.b16 %v668, %v667
      %v682 = vpack.c.b16 %v670, %v669
      %v683 = vpack.c.b16 %v672, %v671
      %v684 = vpack.c.b16 %v674, %v673
      %v685 = vpack.c.b16 %v676, %v675
      %v686 = vpack.c.b16 %v678, %v677
      %695 = vmatprep.subr.bf16.mxu0 0
      %696 = vmatpush1.bf16.msra.mxu0 %v679
      %697 = vmatprep.subr.bf16.mxu0 0
      %698 = vmatpush1.bf16.msra.mxu0 %v680
      %699 = vmatprep.subr.bf16.mxu0 0
      %700 = vmatpush1.bf16.msra.mxu0 %v681
      %701 = vmatprep.subr.bf16.mxu0 0
      %702 = vmatpush1.bf16.msra.mxu0 %v682
      %703 = vmatprep.subr.bf16.mxu0 0
      %704 = vmatpush1.bf16.msra.mxu0 %v683
      %705 = vmatprep.subr.bf16.mxu0 0
      %706 = vmatpush1.bf16.msra.mxu0 %v684
      %707 = vmatprep.subr.bf16.mxu0 0
      %708 = vmatpush1.bf16.msra.mxu0 %v685
      %709 = vmatprep.subr.bf16.mxu0 0
      %710 = vmatpush1.bf16.msra.mxu0 %v686
      %711 = vmatprep.subr.bf16.mxu0 0
      %712 = vmatpush1.bf16.msra.mxu0 0
      %713 = vmatprep.subr.bf16.mxu0 0
      %714 = vmatpush1.bf16.msra.mxu0 0
      %715 = vmatprep.subr.bf16.mxu0 0
      %716 = vmatpush1.bf16.msra.mxu0 0
      %717 = vmatprep.subr.bf16.mxu0 0
      %718 = vmatpush1.bf16.msra.mxu0 0
      %719 = vmatprep.subr.bf16.mxu0 0
      %720 = vmatpush1.bf16.msra.mxu0 0
      %721 = vmatprep.subr.bf16.mxu0 0
      %722 = vmatpush1.bf16.msra.mxu0 0
      %723 = vmatprep.subr.bf16.mxu0 0
      %724 = vmatpush1.bf16.msra.mxu0 0
      %725 = vmatprep.subr.bf16.mxu0 0
      %726 = vmatpush1.bf16.msra.mxu0 0
      %727 = vmatprep.mubr.bf16.mxu0 0
      %728 = vmatmul.mubr.bf16.gmra.mrb[0].mxu0 %v645
      %v729 = vpop.f32.mrb[0].mxu0
      %v730 = vadd.f32 0.0, %v729
      %v731 = vpop.f32.mrb[0].mxu0
      %v732 = vpop.f32.mrb[0].mxu0
      %v733 = vadd.f32 0.0, %v732
      %v734 = vpop.f32.mrb[0].mxu0
      %735 = vdwg.mxu0
      %v753 = vunpack.c.l.b16 %v592
      %v754 = vunpack.c.l.b16 %v593
      %v755 = vunpack.c.l.b16 %v594
      %v756 = vunpack.c.l.b16 %v595
      %v757 = vunpack.c.l.b16 %v596
      %v758 = vunpack.c.l.b16 %v597
      %v759 = vunpack.c.l.b16 %v598
      %v760 = vunpack.c.l.b16 %v599
      %v761 = vunpack.c.l.b16 %v600
      %v762 = vunpack.c.l.b16 %v601
      %v763 = vunpack.c.l.b16 %v602
      %v764 = vunpack.c.l.b16 %v603
      %v765 = vunpack.c.l.b16 %v604
      %v766 = vunpack.c.l.b16 %v605
      %v767 = vunpack.c.l.b16 %v606
      %v768 = vunpack.c.l.b16 %v607
      %v769 = vpack.c.b16 %v754, %v753
      %v770 = vpack.c.b16 %v756, %v755
      %v771 = vpack.c.b16 %v758, %v757
      %v772 = vpack.c.b16 %v760, %v759
      %v773 = vpack.c.b16 %v762, %v761
      %v774 = vpack.c.b16 %v764, %v763
      %v775 = vpack.c.b16 %v766, %v765
      %v776 = vpack.c.b16 %v768, %v767
      %785 = vmatprep.subr.bf16.mxu0 0
      %786 = vmatpush1.bf16.msra.mxu0 %v769
      %787 = vmatprep.subr.bf16.mxu0 0
      %788 = vmatpush1.bf16.msra.mxu0 %v770
      %789 = vmatprep.subr.bf16.mxu0 0
      %790 = vmatpush1.bf16.msra.mxu0 %v771
      %791 = vmatprep.subr.bf16.mxu0 0
      %792 = vmatpush1.bf16.msra.mxu0 %v772
      %793 = vmatprep.subr.bf16.mxu0 0
      %794 = vmatpush1.bf16.msra.mxu0 %v773
      %795 = vmatprep.subr.bf16.mxu0 0
      %796 = vmatpush1.bf16.msra.mxu0 %v774
      %797 = vmatprep.subr.bf16.mxu0 0
      %798 = vmatpush1.bf16.msra.mxu0 %v775
      %799 = vmatprep.subr.bf16.mxu0 0
      %800 = vmatpush1.bf16.msra.mxu0 %v776
      %801 = vmatprep.subr.bf16.mxu0 0
      %802 = vmatpush1.bf16.msra.mxu0 0
      %803 = vmatprep.subr.bf16.mxu0 0
      %804 = vmatpush1.bf16.msra.mxu0 0
      %805 = vmatprep.subr.bf16.mxu0 0
      %806 = vmatpush1.bf16.msra.mxu0 0
      %807 = vmatprep.subr.bf16.mxu0 0
      %808 = vmatpush1.bf16.msra.mxu0 0
      %809 = vmatprep.subr.bf16.mxu0 0
      %810 = vmatpush1.bf16.msra.mxu0 0
      %811 = vmatprep.subr.bf16.mxu0 0
      %812 = vmatpush1.bf16.msra.mxu0 0
      %813 = vmatprep.subr.bf16.mxu0 0
      %814 = vmatpush1.bf16.msra.mxu0 0
      %815 = vmatprep.subr.bf16.mxu0 0
      %816 = vmatpush1.bf16.msra.mxu0 0
      %817 = vmatprep.mubr.bf16.mxu0 0
      %818 = vmatmul.mubr.bf16.gmra.mrb[0].mxu0 %v632
      %v819 = vpop.f32.mrb[0].mxu0
      %v820 = vadd.f32 %v730, %v819
      %v821 = vpop.f32.mrb[0].mxu0
      %v822 = vpop.f32.mrb[0].mxu0
      %v823 = vadd.f32 %v733, %v822
      %v824 = vpop.f32.mrb[0].mxu0
      %825 = vdwg.mxu0
      %v826 = vld [vmem:[#allocation3] sm:$0xe]
      %s827 = scalar_lea.vmem %s3, 128
      %v828 = vld [vmem:[%s827] sm:$0xf]
      %v829 = vld [vmem:[%s827 + $0x4] sm:$0xf]
      %v830 = vld [vmem:[%s827 + $0x8] sm:$0xf]
      %v831 = vld [vmem:[%s827 + $0xc] sm:$0xf]
      %v832 = vld [vmem:[%s827 + $0x10] sm:$0xf]
      %v833 = vld [vmem:[%s827 + $0x14] sm:$0xf]
      %v834 = vld [vmem:[%s827 + $0x18] sm:$0xf]
      %v835 = vld [vmem:[%s827 + $0x1c] sm:$0xf]
      %v836 = vld [vmem:[%s827 + $0x20] sm:$0xf]
      %v837 = vld [vmem:[%s827 + $0x24] sm:$0xf]
      %v838 = vld [vmem:[%s827 + $0x28] sm:$0xf]
      %v839 = vld [vmem:[%s827 + $0x2c] sm:$0xf]
      %v840 = vld [vmem:[%s827 + $0x30] sm:$0xf]
      %v841 = vld [vmem:[%s827 + $0x34] sm:$0xf]
      %v842 = vld [vmem:[%s827 + $0x38] sm:$0xf]
      %v843 = vld [vmem:[%s827 + $0x3c] sm:$0xf]
      %v845 = vunpack.c.l.b16 %v826
      %v846 = vpack.c.b16 %v630, %v845
      %v847 = vrot.slane %v846, 1
      %v848 = vrot.slane %v633, 1
      %v849 = vsel %vm461, %v847, %v848
      %v867 = vunpack.c.l.b16 %v828
      %v868 = vunpack.c.l.b16 %v829
      %v869 = vunpack.c.l.b16 %v830
      %v870 = vunpack.c.l.b16 %v831
      %v871 = vunpack.c.l.b16 %v832
      %v872 = vunpack.c.l.b16 %v833
      %v873 = vunpack.c.l.b16 %v834
      %v874 = vunpack.c.l.b16 %v835
      %v875 = vunpack.c.l.b16 %v836
      %v876 = vunpack.c.l.b16 %v837
      %v877 = vunpack.c.l.b16 %v838
      %v878 = vunpack.c.l.b16 %v839
      %v879 = vunpack.c.l.b16 %v840
      %v880 = vunpack.c.l.b16 %v841
      %v881 = vunpack.c.l.b16 %v842
      %v882 = vunpack.c.l.b16 %v843
      %v883 = vpack.c.b16 %v868, %v867
      %v884 = vpack.c.b16 %v870, %v869
      %v885 = vpack.c.b16 %v872, %v871
      %v886 = vpack.c.b16 %v874, %v873
      %v887 = vpack.c.b16 %v876, %v875
      %v888 = vpack.c.b16 %v878, %v877
      %v889 = vpack.c.b16 %v880, %v879
      %v890 = vpack.c.b16 %v882, %v881
      %899 = vmatprep.subr.bf16.mxu0 0
      %900 = vmatpush1.bf16.msra.mxu0 %v883
      %901 = vmatprep.subr.bf16.mxu0 0
      %902 = vmatpush1.bf16.msra.mxu0 %v884
      %903 = vmatprep.subr.bf16.mxu0 0
      %904 = vmatpush1.bf16.msra.mxu0 %v885
      %905 = vmatprep.subr.bf16.mxu0 0
      %906 = vmatpush1.bf16.msra.mxu0 %v886
      %907 = vmatprep.subr.bf16.mxu0 0
      %908 = vmatpush1.bf16.msra.mxu0 %v887
      %909 = vmatprep.subr.bf16.mxu0 0
      %910 = vmatpush1.bf16.msra.mxu0 %v888
      %911 = vmatprep.subr.bf16.mxu0 0
      %912 = vmatpush1.bf16.msra.mxu0 %v889
      %913 = vmatprep.subr.bf16.mxu0 0
      %914 = vmatpush1.bf16.msra.mxu0 %v890
      %915 = vmatprep.subr.bf16.mxu0 0
      %916 = vmatpush1.bf16.msra.mxu0 0
      %917 = vmatprep.subr.bf16.mxu0 0
      %918 = vmatpush1.bf16.msra.mxu0 0
      %919 = vmatprep.subr.bf16.mxu0 0
      %920 = vmatpush1.bf16.msra.mxu0 0
      %921 = vmatprep.subr.bf16.mxu0 0
      %922 = vmatpush1.bf16.msra.mxu0 0
      %923 = vmatprep.subr.bf16.mxu0 0
      %924 = vmatpush1.bf16.msra.mxu0 0
      %925 = vmatprep.subr.bf16.mxu0 0
      %926 = vmatpush1.bf16.msra.mxu0 0
      %927 = vmatprep.subr.bf16.mxu0 0
      %928 = vmatpush1.bf16.msra.mxu0 0
      %929 = vmatprep.subr.bf16.mxu0 0
      %930 = vmatpush1.bf16.msra.mxu0 0
      %931 = vmatprep.mubr.bf16.mxu0 0
      %932 = vmatmul.mubr.bf16.gmra.mrb[0].mxu0 %v849
      %v933 = vpop.f32.mrb[0].mxu0
      %v934 = vadd.f32 0.0, %v933
      %v935 = vpop.f32.mrb[0].mxu0
      %v936 = vpop.f32.mrb[0].mxu0
      %v937 = vadd.f32 0.0, %v936
      %v938 = vpop.f32.mrb[0].mxu0
      %939 = vdwg.mxu0
      %v940 = vadd.f32 %v820, %v934
      %v941 = vadd.f32 %v823, %v937
      %v942 = vld [vmem:[%s4] sm:$0x1]
      %v944 = vlaneseq
      %v945 = vshrl.u32 %v944, 7
      %v946 = vsub.s32 0, %v945
      %v947 = vrot.slane %v942, %v946
      %v949 = vadd.f32 %v940, %v947
      %v950 = vadd.f32 %v941, %v947
      %v951 = vmax.f32 %v949, 0.0
      %v952 = vmax.f32 %v950, 0.0
      %953 = vst [vmem:[%s224] sm:$0xff] %v951
      %954 = vst [vmem:[%s224 + $0x8] sm:$0xff] %v952
      %p955 = scmp.lt.s32.totalorder %s16, 1
      %s956 = scalar_select %p955, %s16, 1
      %s957 = smul.addr %s956, 2
      %s958 = smul.addr %s957, 8
      %s959 = scalar_lea.vmem %s5, %s958
      // Predicated region
      $region41: #{conv_block_forward.1} parent=39 // pred_check
        %p960 = pneg %p144
      $region42: #{conv_block_forward.1} parent=39 // pred_check_branch
        %962 = sbr.rel (%p960) target = $region44
      $region43: #{conv_block_forward.1} parent=39 // pred_region
        _
      $region44: #{conv_block_forward.1} parent=39 // pred_fallthru
        _
    $region40: #{conv_block_forward.1} parent=5 // pred_fallthru
      _
    %p963 = scmp.le.s32.totalorder 2, %s11
    // Predicated region
    $region45: #{conv_block_forward.1} parent=5 // pred_check
      %p964 = pneg %p963
    $region46: #{conv_block_forward.1} parent=5 // pred_check_branch
      %966 = sbr.rel (%p964) target = $region48
    $region47: #{conv_block_forward.1} parent=5 // pred_region
      %s967 = ssub.s32 %s11, 2
      // Predicated region
      $region49: #{conv_block_forward.1} parent=47 // pred_check
        %p968 = pneg %p150
      $region50: #{conv_block_forward.1} parent=47 // pred_check_branch
        %970 = sbr.rel (%p968) target = $region52
      $region51: #{conv_block_forward.1} parent=47 // pred_region
        %p971 = scmp.lt.s32.totalorder %s17, 1
        %s972 = scalar_select %p971, %s17, 1
        %s973 = smul.addr %s972, 2
        %s974 = smul.addr %s973, 8
        %s975 = scalar_lea.vmem %s5, %s974
      $region52: #{conv_block_forward.1} parent=47 // pred_fallthru
        _
    $region48: #{conv_block_forward.1} parent=5 // pred_fallthru
      _
  $region6: #{conv_block_forward.1} parent=0 // loop_footer
    %s15 = sadd.s32 1, %s11
  $region7: #{conv_block_forward.1} parent=0 // loop_footer_branch
    %10 = sbr.rel target = $region3
  $region8: #{conv_block_forward.1} parent=0 // loop_exit
    _

// kernel: conv_block_forward.1
$region0: #{conv_block_forward.1}
  #allocation0 [shape = 'u32[]', space=smem, size = 0x4, offset = 0x4, fixed_abs, tag = 'smem constant byte address 0x4 - core index']
  #allocation1 [shape = 'u32[144,128]{1,0:T(1,128)}', space=vmem, size = 0x12000, scoped, tag = 'internal scratch']
  #allocation2 [shape = 'bf16[18,64]{1,0:T(8,128)(2,1)}', space=vmem, size = 0x1800, scoped, tag = 'scratch operand']
  #allocation3 [shape = 'bf16[18,128]{1,0:T(8,128)(2,1)}', space=vmem, size = 0x1800, scoped, tag = 'scratch operand']
  %s0 = inlined_call_operand.vmem [shape: bf16[2,16,64], index: 0, kind: input, shape index: {}]
  %s1 = inlined_call_operand.vmem [shape: bf16[3,64,128], index: 1, kind: input, shape index: {}]
  %s2 = inlined_call_operand.vmem [shape: f32[1,128], index: 2, kind: input, shape index: {}]
  %s3 = inlined_call_operand.vmem [shape: bf16[3,128,128], index: 3, kind: input, shape index: {}]
  %s4 = inlined_call_operand.vmem [shape: f32[1,128], index: 4, kind: input, shape index: {}]
  %s5 = inlined_call_operand.vmem [shape: f32[2,16,128], index: 5, kind: output, shape index: {}]
  %s6 = sld [smem:[#allocation0]]
  $region53: #{conv_block_forward.1} parent=0
    _
  %s8 = ssub.s32 1, %s6
  %s9 = scalar_select 0, %s8, %s6
  loop: start=0, step=1, limit=4
  $region2: #{conv_block_forward.1} parent=0 // loop_pre_header
    _
  $region3: #{conv_block_forward.1} parent=0 // loop_header
    %s11 = sphi 0, %s15
    %p12 = scmp.ge.s32.totalorder %s11, 4
    %s21 = sphi 0, %s23
    %s24 = sphi 0, %s21
    %s25 = sphi 0, %s24
    %s41 = sphi 0, %s25
    %s45 = sphi 0, %s45
    %s47 = sphi 0, %s45
    %s48 = sphi 0, %s47
    %s62 = sphi 0, %s48
    %s66 = sphi 0, %s66
    %s68 = sphi 0, %s66
    %s69 = sphi 0, %s68
    %s83 = sphi 0, %s69
    %s87 = sphi 0, %s87
    %s89 = sphi 0, %s87
    %s90 = sphi 0, %s89
    %s104 = sphi 0, %s90
    %s108 = sphi 0, %s108
    %s110 = sphi 0, %s108
    %s111 = sphi 0, %s110
    %s125 = sphi 0, %s111
    %s131 = sphi 0, %s133
    %s134 = sphi 0, %s131
    %s135 = sphi 0, %s134
    %s151 = sphi 0, %s135
  $region4: #{conv_block_forward.1} parent=0 // loop_header_branch
    %14 = sbr.rel (%p12) target = $region8
  $region5: #{conv_block_forward.1} parent=0 // loop_body
    %s16 = ssub.s32 %s11, 1
    %s17 = ssub.s32 %s11, 2
    %s18 = sadd.s32 %s11, 1
    %s19 = ssub.s32 %s11, %s18
    %p20 = scmp.eq.s32.totalorder %s19, 0
    %s22 = sadd.s32 %s21, 1
    %s23 = scalar_select %p20, %s21, %s22
    %p26 = pneg %p20
    %p27 = scmp.eq.s32.totalorder %s11, 1
    %p28 = por %p26, %p27
    %p29 = scmp.ne.s32.totalorder %s21, %s24
    %p30 = scmp.eq.s32.totalorder %s11, 0
    %p31 = por %p29, %p30
    %p32 = scmp.ne.s32.totalorder %s21, %s24
    %p33 = scmp.eq.s32.totalorder %s16, 1
    %p34 = por %p32, %p33
    %p35 = scmp.ne.s32.totalorder %s24, %s25
    %p36 = scmp.eq.s32.totalorder %s16, 0
    %p37 = por %p35, %p36
    %p38 = scmp.ne.s32.totalorder %s24, %s25
    %p39 = scmp.eq.s32.totalorder %s17, 1
    %p40 = por %p38, %p39
    %p42 = scmp.ne.s32.totalorder %s25, %s41
    %p43 = scmp.eq.s32.totalorder %s17, 0
    %p44 = por %p42, %p43
    %s46 = sadd.s32 %s45, 1
    %p49 = scmp.eq.s32.totalorder %s11, 1
    %p50 = scmp.ne.s32.totalorder %s45, %s47
    %p51 = scmp.eq.s32.totalorder %s11, 0
    %p52 = por %p50, %p51
    %p53 = scmp.ne.s32.totalorder %s45, %s47
    %p54 = scmp.eq.s32.totalorder %s16, 1
    %p55 = por %p53, %p54
    %p56 = scmp.ne.s32.totalorder %s47, %s48
    %p57 = scmp.eq.s32.totalorder %s16, 0
    %p58 = por %p56, %p57
    %p59 = scmp.ne.s32.totalorder %s47, %s48
    %p60 = scmp.eq.s32.totalorder %s17, 1
    %p61 = por %p59, %p60
    %p63 = scmp.ne.s32.totalorder %s48, %s62
    %p64 = scmp.eq.s32.totalorder %s17, 0
    %p65 = por %p63, %p64
    %s67 = sadd.s32 %s66, 1
    %p70 = scmp.eq.s32.totalorder %s11, 1
    %p71 = scmp.ne.s32.totalorder %s66, %s68
    %p72 = scmp.eq.s32.totalorder %s11, 0
    %p73 = por %p71, %p72
    %p74 = scmp.ne.s32.totalorder %s66, %s68
    %p75 = scmp.eq.s32.totalorder %s16, 1
    %p76 = por %p74, %p75
    %p77 = scmp.ne.s32.totalorder %s68, %s69
    %p78 = scmp.eq.s32.totalorder %s16, 0
    %p79 = por %p77, %p78
    %p80 = scmp.ne.s32.totalorder %s68, %s69
    %p81 = scmp.eq.s32.totalorder %s17, 1
    %p82 = por %p80, %p81
    %p84 = scmp.ne.s32.totalorder %s69, %s83
    %p85 = scmp.eq.s32.totalorder %s17, 0
    %p86 = por %p84, %p85
    %s88 = sadd.s32 %s87, 1
    %p91 = scmp.eq.s32.totalorder %s11, 1
    %p92 = scmp.ne.s32.totalorder %s87, %s89
    %p93 = scmp.eq.s32.totalorder %s11, 0
    %p94 = por %p92, %p93
    %p95 = scmp.ne.s32.totalorder %s87, %s89
    %p96 = scmp.eq.s32.totalorder %s16, 1
    %p97 = por %p95, %p96
    %p98 = scmp.ne.s32.totalorder %s89, %s90
    %p99 = scmp.eq.s32.totalorder %s16, 0
    %p100 = por %p98, %p99
    %p101 = scmp.ne.s32.totalorder %s89, %s90
    %p102 = scmp.eq.s32.totalorder %s17, 1
    %p103 = por %p101, %p102
    %p105 = scmp.ne.s32.totalorder %s90, %s104
    %p106 = scmp.eq.s32.totalorder %s17, 0
    %p107 = por %p105, %p106
    %s109 = sadd.s32 %s108, 1
    %p112 = scmp.eq.s32.totalorder %s11, 1
    %p113 = scmp.ne.s32.totalorder %s108, %s110
    %p114 = scmp.eq.s32.totalorder %s11, 0
    %p115 = por %p113, %p114
    %p116 = scmp.ne.s32.totalorder %s108, %s110
    %p117 = scmp.eq.s32.totalorder %s16, 1
    %p118 = por %p116, %p117
    %p119 = scmp.ne.s32.totalorder %s110, %s111
    %p120 = scmp.eq.s32.totalorder %s16, 0
    %p121 = por %p119, %p120
    %p122 = scmp.ne.s32.totalorder %s110, %s111
    %p123 = scmp.eq.s32.totalorder %s17, 1
    %p124 = por %p122, %p123
    %p126 = scmp.ne.s32.totalorder %s111, %s125
    %p127 = scmp.eq.s32.totalorder %s17, 0
    %p128 = por %p126, %p127
    %s129 = ssub.s32 %s11, %s18
    %p130 = scmp.eq.s32.totalorder %s129, 0
    %s132 = sadd.s32 %s131, 1
    %s133 = scalar_select %p130, %s131, %s132
    %p136 = pneg %p130
    %p137 = scmp.eq.s32.totalorder %s11, 1
    %p138 = por %p136, %p137
    %p139 = scmp.ne.s32.totalorder %s131, %s134
    %p140 = scmp.eq.s32.totalorder %s11, 0
    %p141 = por %p139, %p140
    %p142 = scmp.ne.s32.totalorder %s131, %s134
    %p143 = scmp.eq.s32.totalorder %s16, 1
    %p144 = por %p142, %p143
    %p145 = scmp.ne.s32.totalorder %s134, %s135
    %p146 = scmp.eq.s32.totalorder %s16, 0
    %p147 = por %p145, %p146
    %p148 = scmp.ne.s32.totalorder %s134, %s135
    %p149 = scmp.eq.s32.totalorder %s17, 1
    %p150 = por %p148, %p149
    %p152 = scmp.ne.s32.totalorder %s135, %s151
    %p153 = scmp.eq.s32.totalorder %s17, 0
    %p154 = por %p152, %p153
    %p155 = scmp.le.s32.totalorder 1, %s11
    %p156 = scmp.lt.s32.totalorder %s11, 3
    %p157 = pnand %p155, %p156
    %p158 = pneg %p157
    // Predicated region
    $region9: #{conv_block_forward.1} parent=5 // pred_check
      _
    $region10: #{conv_block_forward.1} parent=5 // pred_check_branch
      %160 = sbr.rel (%p157) target = $region12
    $region11: #{conv_block_forward.1} parent=5 // pred_region
      %s161 = ssub.s32 %s11, 1
      // Predicated region
      $region13: #{conv_block_forward.1} parent=11 // pred_check
        %p162 = pneg %p58
      $region14: #{conv_block_forward.1} parent=11 // pred_check_branch
        %164 = sbr.rel (%p162) target = $region16
      $region15: #{conv_block_forward.1} parent=11 // pred_region
        _
      $region16: #{conv_block_forward.1} parent=11 // pred_fallthru
        _
      // Predicated region
      $region17: #{conv_block_forward.1} parent=11 // pred_check
        %p165 = pneg %p79
      $region18: #{conv_block_forward.1} parent=11 // pred_check_branch
        %167 = sbr.rel (%p165) target = $region20
      $region19: #{conv_block_forward.1} parent=11 // pred_region
        _
      $region20: #{conv_block_forward.1} parent=11 // pred_fallthru
        _
      // Predicated region
      $region21: #{conv_block_forward.1} parent=11 // pred_check
        %p168 = pneg %p100
      $region22: #{conv_block_forward.1} parent=11 // pred_check_branch
        %170 = sbr.rel (%p168) target = $region24
      $region23: #{conv_block_forward.1} parent=11 // pred_region
        _
      $region24: #{conv_block_forward.1} parent=11 // pred_fallthru
        _
      // Predicated region
      $region25: #{conv_block_forward.1} parent=11 // pred_check
        %p171 = pneg %p121
      $region26: #{conv_block_forward.1} parent=11 // pred_check_branch
        %173 = sbr.rel (%p171) target = $region28
      $region27: #{conv_block_forward.1} parent=11 // pred_region
        _
      $region28: #{conv_block_forward.1} parent=11 // pred_fallthru
        _
    $region12: #{conv_block_forward.1} parent=5 // pred_fallthru
      _
    %p174 = scmp.lt.s32.totalorder %s11, 2
    // Predicated region
    $region29: #{conv_block_forward.1} parent=5 // pred_check
      %p175 = pneg %p174
    $region30: #{conv_block_forward.1} parent=5 // pred_check_branch
      %177 = sbr.rel (%p175) target = $region32
    $region31: #{conv_block_forward.1} parent=5 // pred_region
      // Predicated region
      $region33: #{conv_block_forward.1} parent=31 // pred_check
        %p178 = pneg %p31
      $region34: #{conv_block_forward.1} parent=31 // pred_check_branch
        %180 = sbr.rel (%p178) target = $region36
      $region35: #{conv_block_forward.1} parent=31 // pred_region
        %p181 = scmp.lt.s32.totalorder %s11, 1
        %s182 = scalar_select %p181, %s11, 1
        %s183 = smul.addr %s182, 2
        %s184 = smul.addr %s183, 4
        %s185 = scalar_lea.vmem %s0, %s184
      $region36: #{conv_block_forward.1} parent=31 // pred_fallthru
        _
    $region32: #{conv_block_forward.1} parent=5 // pred_fallthru
      _
    %p186 = scmp.le.s32.totalorder 1, %s11
    %p187 = scmp.lt.s32.totalorder %s11, 3
    %p188 = pnand %p186, %p187
    %p189 = pneg %p188
    // Predicated region
    $region37: #{conv_block_forward.1} parent=5 // pred_check
      _
    $region38: #{conv_block_forward.1} parent=5 // pred_check_branch
      %191 = sbr.rel (%p188) target = $region40
    $region39: #{conv_block_forward.1} parent=5 // pred_region
      %s192 = ssub.s32 %s11, 1
      %p193 = scmp.lt.s32.totalorder %s16, 1
      %s194 = scalar_select %p193, %s16, 1
      %s195 = smul.addr %s194, 2
      %s196 = smul.addr %s195, 4
      %s197 = scalar_lea.vmem %s0, %s196
      %p198 = pneg %p37
      %p199 = pneg %p34
      %p200 = pneg %p58
      %p201 = pneg %p55
      %p202 = pneg %p79
      %p203 = pneg %p76
      %p204 = pneg %p100
      %p205 = pneg %p97
      %p206 = pneg %p121
      %p207 = pneg %p118
      %p208 = pneg %p147
      %p209 = pneg %p144
      %p210 = scmp.lt.s32.totalorder %s16, 1
      %s211 = scalar_select %p210, %s16, 1
      %s212 = smul.addr %s211, 2
      %s213 = smul.addr %s212, 8
      %s214 = scalar_lea.vmem %s5, %s213
      %p215 = scmp.lt.s32.totalorder %s16, 1
      %s216 = scalar_select %p215, %s16, 1
      %s217 = smul.addr %s216, 2
      %s218 = smul.addr %s217, 4
      %s219 = scalar_lea.vmem %s0, %s218
      %p220 = scmp.lt.s32.totalorder %s16, 1
      %s221 = scalar_select %p220, %s16, 1
      %s222 = smul.addr %s221, 2
      %s223 = smul.addr %s222, 8
      %s224 = scalar_lea.vmem %s5, %s223
      %vm226 = vcmask 516096
      %vm227 = vsmask.f32 256
      %vm228 = vmand %vm226, %vm227
      %v229 = vld [vmem:[#allocation2] sm:$0x1]
      %v230 = vsel %vm228, 0, %v229
      %231 = vst [vmem:[#allocation2] sm:$0x1] %v230
      %vm232 = vsmask.f32 7938
      %vm233 = vmand %vm226, %vm232
      %v234 = vld [vmem:[#allocation2 + $0x8] sm:$0x1]
      %v235 = vsel %vm233, 0, %v234
      %236 = vst [vmem:[#allocation2 + $0x8] sm:$0x1] %v235
      %v237 = vld [vmem:[%s219] sm:$0xf]
      %v238 = vld [vmem:[%s219 + $0x4] sm:$0xf]
      %vm239 = vsmask.f32 4368
      %vm240 = vmor %vm227, %vm239
      %v242 = vshrl.u32 %v237, 16
      %v244 = vrot.slane %v242, 7
      %v245 = vshll.u32 %v237, 16
      %v247 = vor.u32 %v244, %v245
      %v248 = vrot.slane %v244, 4
      %v250 = vshrl.u32 %v238, 16
      %v252 = vrot.slane %v250, 7
      %v253 = vshll.u32 %v238, 16
      %v255 = vor.u32 %v252, %v253
      %v256 = vsel %vm240, %v248, %v255
      %v257 = vrot.slane %v252, 4
      %vm261 = vcmask 519168
      %vm262 = vmand %vm261, %vm232
      %v263 = vld [vmem:[#allocation2] sm:$0xf]
      %v264 = vsel %vm262, %v247, %v263
      %265 = vst [vmem:[#allocation2] sm:$0xf] %v264
      %vm266 = vcmask 519168
      %267 = vst.msk [vmem:[#allocation2 + $0x4] sm:$0xf] %vm266, %v256
      %v268 = vld [vmem:[#allocation2 + $0x8] sm:$0x1]
      %v269 = vsel %vm228, %v257, %v268
      %270 = vst [vmem:[#allocation2 + $0x8] sm:$0x1] %v269
      %v271 = vld [vmem:[#allocation2] sm:$0xf]
      %v272 = vld [vmem:[#allocation2 + $0x4] sm:$0xf]
      %v273 = vld [vmem:[%s1] sm:$0xf]
      %v274 = vld [vmem:[%s1 + $0x4] sm:$0xf]
      %v275 = vld [vmem:[%s1 + $0x8] sm:$0xf]
      %v276 = vld [vmem:[%s1 + $0xc] sm:$0xf]
      %v277 = vld [vmem:[%s1 + $0x10] sm:$0xf]
      %v278 = vld [vmem:[%s1 + $0x14] sm:$0xf]
      %v279 = vld [vmem:[%s1 + $0x18] sm:$0xf]
      %v280 = vld [vmem:[%s1 + $0x1c] sm:$0xf]
      %v281 = vld [vmem:[#allocation2 + $0x8] sm:$0x1]
      %s282 = scalar_lea.vmem %s1, 32
      %v283 = vld [vmem:[%s282] sm:$0xf]
      %v284 = vld [vmem:[%s282 + $0x4] sm:$0xf]
      %v285 = vld [vmem:[%s282 + $0x8] sm:$0xf]
      %v286 = vld [vmem:[%s282 + $0xc] sm:$0xf]
      %v287 = vld [vmem:[%s282 + $0x10] sm:$0xf]
      %v288 = vld [vmem:[%s282 + $0x14] sm:$0xf]
      %v289 = vld [vmem:[%s282 + $0x18] sm:$0xf]
      %v290 = vld [vmem:[%s282 + $0x1c] sm:$0xf]
      %v294 = vunpack.c.l.b16 %v271
      %v295 = vunpack.c.l.b16 %v272
      %v296 = vunpack.c.l.b16 %v281
      %v297 = vpack.c.b16 %v295, %v294
      %v298 = vpack.c.b16 %v296, %v296
      %vm299 = vsmask.f32 7424
      %v301 = vshrl.u32 %v297, 16
      %v303 = vshll.u32 %v297, 16
      %v305 = vrot.slane %v303, 1
      %v306 = vor.u32 %v301, %v305
      %v308 = vshll.u32 %v298, 16
      %v310 = vrot.slane %v308, 1
      %v311 = vsel %vm299, %v306, %v310
      %v320 = vunpack.c.l.b16 %v283
      %v321 = vunpack.c.l.b16 %v284
      %v322 = vunpack.c.l.b16 %v285
      %v323 = vunpack.c.l.b16 %v286
      %v324 = vunpack.c.l.b16 %v287
      %v325 = vunpack.c.l.b16 %v288
      %v326 = vunpack.c.l.b16 %v289
      %v327 = vunpack.c.l.b16 %v290
      %v328 = vpack.c.b16 %v321, %v320
      %v329 = vpack.c.b16 %v323, %v322
      %v330 = vpack.c.b16 %v325, %v324
      %v331 = vpack.c.b16 %v327, %v326
      %vm336 = vcmask 523264
      %v338 = vsel %vm336, %v311, 0
      %340 = vmatprep.subr.bf16.mxu0 0
      %341 = vmatpush1.bf16.msra.mxu0 %v328
      %342 = vmatprep.subr.bf16.mxu0 0
      %343 = vmatpush1.bf16.msra.mxu0 %v329
      %344 = vmatprep.subr.bf16.mxu0 0
      %345 = vmatpush1.bf16.msra.mxu0 %v330
      %346 = vmatprep.subr.bf16.mxu0 0
      %347 = vmatpush1.bf16.msra.mxu0 %v331
      %348 = vmatprep.subr.bf16.mxu0 0
      %349 = vmatpush1.bf16.msra.mxu0 0
      %350 = vmatprep.subr.bf16.mxu0 0
      %351 = vmatpush1.bf16.msra.mxu0 0
      %352 = vmatprep.subr.bf16.mxu0 0
      %353 = vmatpush1.bf16.msra.mxu0 0
      %354 = vmatprep.subr.bf16.mxu0 0
      %355 = vmatpush1.bf16.msra.mxu0 0
      %356 = vmatprep.subr.bf16.mxu0 0
      %357 = vmatpush1.bf16.msra.mxu0 0
      %358 = vmatprep.subr.bf16.mxu0 0
      %359 = vmatpush1.bf16.msra.mxu0 0
      %360 = vmatprep.subr.bf16.mxu0 0
      %361 = vmatpush1.bf16.msra.mxu0 0
      %362 = vmatprep.subr.bf16.mxu0 0
      %363 = vmatpush1.bf16.msra.mxu0 0
      %364 = vmatprep.subr.bf16.mxu0 0
      %365 = vmatpush1.bf16.msra.mxu0 0
      %366 = vmatprep.subr.bf16.mxu0 0
      %367 = vmatpush1.bf16.msra.mxu0 0
      %368 = vmatprep.subr.bf16.mxu0 0
      %369 = vmatpush1.bf16.msra.mxu0 0
      %370 = vmatprep.subr.bf16.mxu0 0
      %371 = vmatpush1.bf16.msra.mxu0 0
      %372 = vmatprep.mubr.bf16.mxu0 0
      %373 = vmatmul.mubr.bf16.gmra.mrb[0].mxu0 %v338
      %v374 = vpop.f32.mrb[0].mxu0
      %v375 = vadd.f32 0.0, %v374
      %v376 = vpop.f32.mrb[0].mxu0
      %v377 = vpop.f32.mrb[0].mxu0
      %v378 = vadd.f32 0.0, %v377
      %v379 = vpop.f32.mrb[0].mxu0
      %380 = vdwg.mxu0
      %v389 = vunpack.c.l.b16 %v273
      %v390 = vunpack.c.l.b16 %v274
      %v391 = vunpack.c.l.b16 %v275
      %v392 = vunpack.c.l.b16 %v276
      %v393 = vunpack.c.l.b16 %v277
      %v394 = vunpack.c.l.b16 %v278
      %v395 = vunpack.c.l.b16 %v279
      %v396 = vunpack.c.l.b16 %v280
      %v397 = vpack.c.b16 %v390, %v389
      %v398 = vpack.c.b16 %v392, %v391
      %v399 = vpack.c.b16 %v394, %v393
      %v400 = vpack.c.b16 %v396, %v395
      %v405 = vsel %vm336, %v297, 0
      %407 = vmatprep.subr.bf16.mxu0 0
      %408 = vmatpush1.bf16.msra.mxu0 %v397
      %409 = vmatprep.subr.bf16.mxu0 0
      %410 = vmatpush1.bf16.msra.mxu0 %v398
      %411 = vmatprep.subr.bf16.mxu0 0
      %412 = vmatpush1.bf16.msra.mxu0 %v399
      %413 = vmatprep.subr.bf16.mxu0 0
      %414 = vmatpush1.bf16.msra.mxu0 %v400
      %415 = vmatprep.subr.bf16.mxu0 0
      %416 = vmatpush1.bf16.msra.mxu0 0
      %417 = vmatprep.subr.bf16.mxu0 0
      %418 = vmatpush1.bf16.msra.mxu0 0
      %419 = vmatprep.subr.bf16.mxu0 0
      %420 = vmatpush1.bf16.msra.mxu0 0
      %421 = vmatprep.subr.bf16.mxu0 0
      %422 = vmatpush1.bf16.msra.mxu0 0
      %423 = vmatprep.subr.bf16.mxu0 0
      %424 = vmatpush1.bf16.msra.mxu0 0
      %425 = vmatprep.subr.bf16.mxu0 0
      %426 = vmatpush1.bf16.msra.mxu0 0
      %427 = vmatprep.subr.bf16.mxu0 0
      %428 = vmatpush1.bf16.msra.mxu0 0
      %429 = vmatprep.subr.bf16.mxu0 0
      %430 = vmatpush1.bf16.msra.mxu0 0
      %431 = vmatprep.subr.bf16.mxu0 0
      %432 = vmatpush1.bf16.msra.mxu0 0
      %433 = vmatprep.subr.bf16.mxu0 0
      %434 = vmatpush1.bf16.msra.mxu0 0
      %435 = vmatprep.subr.bf16.mxu0 0
      %436 = vmatpush1.bf16.msra.mxu0 0
      %437 = vmatprep.subr.bf16.mxu0 0
      %438 = vmatpush1.bf16.msra.mxu0 0
      %439 = vmatprep.mubr.bf16.mxu0 0
      %440 = vmatmul.mubr.bf16.gmra.mrb[0].mxu0 %v405
      %v441 = vpop.f32.mrb[0].mxu0
      %v442 = vadd.f32 %v375, %v441
      %v443 = vpop.f32.mrb[0].mxu0
      %v444 = vpop.f32.mrb[0].mxu0
      %v445 = vadd.f32 %v378, %v444
      %v446 = vpop.f32.mrb[0].mxu0
      %447 = vdwg.mxu0
      %v448 = vld [vmem:[#allocation2] sm:$0xe]
      %s449 = scalar_lea.vmem %s1, 64
      %v450 = vld [vmem:[%s449] sm:$0xf]
      %v451 = vld [vmem:[%s449 + $0x4] sm:$0xf]
      %v452 = vld [vmem:[%s449 + $0x8] sm:$0xf]
      %v453 = vld [vmem:[%s449 + $0xc] sm:$0xf]
      %v454 = vld [vmem:[%s449 + $0x10] sm:$0xf]
      %v455 = vld [vmem:[%s449 + $0x14] sm:$0xf]
      %v456 = vld [vmem:[%s449 + $0x18] sm:$0xf]
      %v457 = vld [vmem:[%s449 + $0x1c] sm:$0xf]
      %v459 = vunpack.c.l.b16 %v448
      %v460 = vpack.c.b16 %v295, %v459
      %vm461 = vcmask 1046528
      %v462 = vrot.slane %v460, 1
      %v463 = vrot.slane %v298, 1
      %v464 = vsel %vm461, %v462, %v463
      %v473 = vunpack.c.l.b16 %v450
      %v474 = vunpack.c.l.b16 %v451
      %v475 = vunpack.c.l.b16 %v452
      %v476 = vunpack.c.l.b16 %v453
      %v477 = vunpack.c.l.b16 %v454
      %v478 = vunpack.c.l.b16 %v455
      %v479 = vunpack.c.l.b16 %v456
      %v480 = vunpack.c.l.b16 %v457
      %v481 = vpack.c.b16 %v474, %v473
      %v482 = vpack.c.b16 %v476, %v475
      %v483 = vpack.c.b16 %v478, %v477
      %v484 = vpack.c.b16 %v480, %v479
      %v490 = vsel %vm336, %v464, 0
      %492 = vmatprep.subr.bf16.mxu0 0
      %493 = vmatpush1.bf16.msra.mxu0 %v481
      %494 = vmatprep.subr.bf16.mxu0 0
      %495 = vmatpush1.bf16.msra.mxu0 %v482
      %496 = vmatprep.subr.bf16.mxu0 0
      %497 = vmatpush1.bf16.msra.mxu0 %v483
      %498 = vmatprep.subr.bf16.mxu0 0
      %499 = vmatpush1.bf16.msra.mxu0 %v484
      %500 = vmatprep.subr.bf16.mxu0 0
      %501 = vmatpush1.bf16.msra.mxu0 0
      %502 = vmatprep.subr.bf16.mxu0 0
      %503 = vmatpush1.bf16.msra.mxu0 0
      %504 = vmatprep.subr.bf16.mxu0 0
      %505 = vmatpush1.bf16.msra.mxu0 0
      %506 = vmatprep.subr.bf16.mxu0 0
      %507 = vmatpush1.bf16.msra.mxu0 0
      %508 = vmatprep.subr.bf16.mxu0 0
      %509 = vmatpush1.bf16.msra.mxu0 0
      %510 = vmatprep.subr.bf16.mxu0 0
      %511 = vmatpush1.bf16.msra.mxu0 0
      %512 = vmatprep.subr.bf16.mxu0 0
      %513 = vmatpush1.bf16.msra.mxu0 0
      %514 = vmatprep.subr.bf16.mxu0 0
      %515 = vmatpush1.bf16.msra.mxu0 0
      %516 = vmatprep.subr.bf16.mxu0 0
      %517 = vmatpush1.bf16.msra.mxu0 0
      %518 = vmatprep.subr.bf16.mxu0 0
      %519 = vmatpush1.bf16.msra.mxu0 0
      %520 = vmatprep.subr.bf16.mxu0 0
      %521 = vmatpush1.bf16.msra.mxu0 0
      %522 = vmatprep.subr.bf16.mxu0 0
      %523 = vmatpush1.bf16.msra.mxu0 0
      %524 = vmatprep.mubr.bf16.mxu0 0
      %525 = vmatmul.mubr.bf16.gmra.mrb[0].mxu0 %v490
      %v526 = vpop.f32.mrb[0].mxu0
      %v527 = vadd.f32 0.0, %v526
      %v528 = vpop.f32.mrb[0].mxu0
      %v529 = vpop.f32.mrb[0].mxu0
      %v530 = vadd.f32 0.0, %v529
      %v531 = vpop.f32.mrb[0].mxu0
      %532 = vdwg.mxu0
      %v533 = vadd.f32 %v442, %v527
      %v534 = vadd.f32 %v445, %v530
      %v535 = vld [vmem:[%s2] sm:$0x1]
      %v537 = vlaneseq
      %v538 = vshrl.u32 %v537, 7
      %v539 = vsub.s32 0, %v538
      %v540 = vrot.slane %v535, %v539
      %v542 = vadd.f32 %v533, %v540
      %v543 = vadd.f32 %v534, %v540
      %v544 = vmax.f32 %v542, 0.0
      %v545 = vmax.f32 %v543, 0.0
      %v546 = vpack.c.bf16 %v545, %v544
      %vm547 = vcmask 1040384
      %vm548 = vmand %vm547, %vm227
      %v549 = vld [vmem:[#allocation3] sm:$0x1]
      %v550 = vsel %vm548, 0, %v549
      %551 = vst [vmem:[#allocation3] sm:$0x1] %v550
      %vm552 = vmand %vm547, %vm232
      %v553 = vld [vmem:[#allocation3 + $0x8] sm:$0x1]
      %v554 = vsel %vm552, 0, %v553
      %555 = vst [vmem:[#allocation3 + $0x8] sm:$0x1] %v554
      %v557 = vunpack.c.l.b16 %v546
      %v558 = vunpack.c.h.b16 %v546
      %v559 = vpack.c.b16 %v557, %v557
      %v560 = vpack.c.b16 %v558, %v558
      %v562 = vshrl.u32 %v559, 16
      %v564 = vrot.slane %v562, 7
      %v565 = vshll.u32 %v559, 16
      %v567 = vor.u32 %v564, %v565
      %v568 = vrot.slane %v564, 4
      %v570 = vshrl.u32 %v560, 16
      %v572 = vrot.slane %v570, 7
      %v573 = vshll.u32 %v560, 16
      %v575 = vor.u32 %v572, %v573
      %v576 = vsel %vm240, %v568, %v575
      %v577 = vrot.slane %v572, 4
      %vm581 = vcmask 1043456
      %vm582 = vmand %vm581, %vm232
      %v583 = vld [vmem:[#allocation3] sm:$0xf]
      %v584 = vsel %vm582, %v567, %v583
      %585 = vst [vmem:[#allocation3] sm:$0xf] %v584
      %586 = vst [vmem:[#allocation3 + $0x4] sm:$0xf] %v576
      %v587 = vld [vmem:[#allocation3 + $0x8] sm:$0x1]
      %v588 = vsel %vm548, %v577, %v587
      %589 = vst [vmem:[#allocation3 + $0x8] sm:$0x1] %v588
      %v590 = vld [vmem:[#allocation3] sm:$0xf]
      %v591 = vld [vmem:[#allocation3 + $0x4] sm:$0xf]
      %v592 = vld [vmem:[%s3] sm:$0xf]
      %v593 = vld [vmem:[%s3 + $0x4] sm:$0xf]
      %v594 = vld [vmem:[%s3 + $0x8] sm:$0xf]
      %v595 = vld [vmem:[%s3 + $0xc] sm:$0xf]
      %v596 = vld [vmem:[%s3 + $0x10] sm:$0xf]
      %v597 = vld [vmem:[%s3 + $0x14] sm:$0xf]
      %v598 = vld [vmem:[%s3 + $0x18] sm:$0xf]
      %v599 = vld [vmem:[%s3 + $0x1c] sm:$0xf]
      %v600 = vld [vmem:[%s3 + $0x20] sm:$0xf]
      %v601 = vld [vmem:[%s3 + $0x24] sm:$0xf]
      %v602 = vld [vmem:[%s3 + $0x28] sm:$0xf]
      %v603 = vld [vmem:[%s3 + $0x2c] sm:$0xf]
      %v604 = vld [vmem:[%s3 + $0x30] sm:$0xf]
      %v605 = vld [vmem:[%s3 + $0x34] sm:$0xf]
      %v606 = vld [vmem:[%s3 + $0x38] sm:$0xf]
      %v607 = vld [vmem:[%s3 + $0x3c] sm:$0xf]
      %v608 = vld [vmem:[#allocation3 + $0x8] sm:$0x1]
      %s609 = scalar_lea.vmem %s3, 64
      %v610 = vld [vmem:[%s609] sm:$0xf]
      %v611 = vld [vmem:[%s609 + $0x4] sm:$0xf]
      %v612 = vld [vmem:[%s609 + $0x8] sm:$0xf]
      %v613 = vld [vmem:[%s609 + $0xc] sm:$0xf]
      %v614 = vld [vmem:[%s609 + $0x10] sm:$0xf]
      %v615 = vld [vmem:[%s609 + $0x14] sm:$0xf]
      %v616 = vld [vmem:[%s609 + $0x18] sm:$0xf]
      %v617 = vld [vmem:[%s609 + $0x1c] sm:$0xf]
      %v618 = vld [vmem:[%s609 + $0x20] sm:$0xf]
      %v619 = vld [vmem:[%s609 + $0x24] sm:$0xf]
      %v620 = vld [vmem:[%s609 + $0x28] sm:$0xf]
      %v621 = vld [vmem:[%s609 + $0x2c] sm:$0xf]
      %v622 = vld [vmem:[%s609 + $0x30] sm:$0xf]
      %v623 = vld [vmem:[%s609 + $0x34] sm:$0xf]
      %v624 = vld [vmem:[%s609 + $0x38] sm:$0xf]
      %v625 = vld [vmem:[%s609 + $0x3c] sm:$0xf]
      %v629 = vunpack.c.l.b16 %v590
      %v630 = vunpack.c.l.b16 %v591
      %v631 = vunpack.c.l.b16 %v608
      %v632 = vpack.c.b16 %v630, %v629
      %v633 = vpack.c.b16 %v631, %v631
      %v635 = vshrl.u32 %v632, 16
      %v637 = vshll.u32 %v632, 16
      %v639 = vrot.slane %v637, 1
      %v640 = vor.u32 %v635, %v639
      %v642 = vshll.u32 %v633, 16
      %v644 = vrot.slane %v642, 1
      %v645 = vsel %vm299, %v640, %v644
      %v663 = vunpack.c.l.b16 %v610
      %v664 = vunpack.c.l.b16 %v611
      %v665 = vunpack.c.l.b16 %v612
      %v666 = vunpack.c.l.b16 %v613
      %v667 = vunpack.c.l.b16 %v614
      %v668 = vunpack.c.l.b16 %v615
      %v669 = vunpack.c.l.b16 %v616
      %v670 = vunpack.c.l.b16 %v617
      %v671 = vunpack.c.l.b16 %v618
      %v672 = vunpack.c.l.b16 %v619
      %v673 = vunpack.c.l.b16 %v620
      %v674 = vunpack.c.l.b16 %v621
      %v675 = vunpack.c.l.b16 %v622
      %v676 = vunpack.c.l.b16 %v623
      %v677 = vunpack.c.l.b16 %v624
      %v678 = vunpack.c.l.b16 %v625
      %v679 = vpack.c.b16 %v664, %v663
      %v680 = vpack.c.b16 %v666, %v665
      %v681 = vpack.c.b16 %v668, %v667
      %v682 = vpack.c.b16 %v670, %v669
      %v683 = vpack.c.b16 %v672, %v671
      %v684 = vpack.c.b16 %v674, %v673
      %v685 = vpack.c.b16 %v676, %v675
      %v686 = vpack.c.b16 %v678, %v677
      %695 = vmatprep.subr.bf16.mxu0 0
      %696 = vmatpush1.bf16.msra.mxu0 %v679
      %697 = vmatprep.subr.bf16.mxu0 0
      %698 = vmatpush1.bf16.msra.mxu0 %v680
      %699 = vmatprep.subr.bf16.mxu0 0
      %700 = vmatpush1.bf16.msra.mxu0 %v681
      %701 = vmatprep.subr.bf16.mxu0 0
      %702 = vmatpush1.bf16.msra.mxu0 %v682
      %703 = vmatprep.subr.bf16.mxu0 0
      %704 = vmatpush1.bf16.msra.mxu0 %v683
      %705 = vmatprep.subr.bf16.mxu0 0
      %706 = vmatpush1.bf16.msra.mxu0 %v684
      %707 = vmatprep.subr.bf16.mxu0 0
      %708 = vmatpush1.bf16.msra.mxu0 %v685
      %709 = vmatprep.subr.bf16.mxu0 0
      %710 = vmatpush1.bf16.msra.mxu0 %v686
      %711 = vmatprep.subr.bf16.mxu0 0
      %712 = vmatpush1.bf16.msra.mxu0 0
      %713 = vmatprep.subr.bf16.mxu0 0
      %714 = vmatpush1.bf16.msra.mxu0 0
      %715 = vmatprep.subr.bf16.mxu0 0
      %716 = vmatpush1.bf16.msra.mxu0 0
      %717 = vmatprep.subr.bf16.mxu0 0
      %718 = vmatpush1.bf16.msra.mxu0 0
      %719 = vmatprep.subr.bf16.mxu0 0
      %720 = vmatpush1.bf16.msra.mxu0 0
      %721 = vmatprep.subr.bf16.mxu0 0
      %722 = vmatpush1.bf16.msra.mxu0 0
      %723 = vmatprep.subr.bf16.mxu0 0
      %724 = vmatpush1.bf16.msra.mxu0 0
      %725 = vmatprep.subr.bf16.mxu0 0
      %726 = vmatpush1.bf16.msra.mxu0 0
      %727 = vmatprep.mubr.bf16.mxu0 0
      %728 = vmatmul.mubr.bf16.gmra.mrb[0].mxu0 %v645
      %v729 = vpop.f32.mrb[0].mxu0
      %v730 = vadd.f32 0.0, %v729
      %v731 = vpop.f32.mrb[0].mxu0
      %v732 = vpop.f32.mrb[0].mxu0
      %v733 = vadd.f32 0.0, %v732
      %v734 = vpop.f32.mrb[0].mxu0
      %735 = vdwg.mxu0
      %v753 = vunpack.c.l.b16 %v592
      %v754 = vunpack.c.l.b16 %v593
      %v755 = vunpack.c.l.b16 %v594
      %v756 = vunpack.c.l.b16 %v595
      %v757 = vunpack.c.l.b16 %v596
      %v758 = vunpack.c.l.b16 %v597
      %v759 = vunpack.c.l.b16 %v598
      %v760 = vunpack.c.l.b16 %v599
      %v761 = vunpack.c.l.b16 %v600
      %v762 = vunpack.c.l.b16 %v601
      %v763 = vunpack.c.l.b16 %v602
      %v764 = vunpack.c.l.b16 %v603
      %v765 = vunpack.c.l.b16 %v604
      %v766 = vunpack.c.l.b16 %v605
      %v767 = vunpack.c.l.b16 %v606
      %v768 = vunpack.c.l.b16 %v607
      %v769 = vpack.c.b16 %v754, %v753
      %v770 = vpack.c.b16 %v756, %v755
      %v771 = vpack.c.b16 %v758, %v757
      %v772 = vpack.c.b16 %v760, %v759
      %v773 = vpack.c.b16 %v762, %v761
      %v774 = vpack.c.b16 %v764, %v763
      %v775 = vpack.c.b16 %v766, %v765
      %v776 = vpack.c.b16 %v768, %v767
      %785 = vmatprep.subr.bf16.mxu0 0
      %786 = vmatpush1.bf16.msra.mxu0 %v769
      %787 = vmatprep.subr.bf16.mxu0 0
      %788 = vmatpush1.bf16.msra.mxu0 %v770
      %789 = vmatprep.subr.bf16.mxu0 0
      %790 = vmatpush1.bf16.msra.mxu0 %v771
      %791 = vmatprep.subr.bf16.mxu0 0
      %792 = vmatpush1.bf16.msra.mxu0 %v772
      %793 = vmatprep.subr.bf16.mxu0 0
      %794 = vmatpush1.bf16.msra.mxu0 %v773
      %795 = vmatprep.subr.bf16.mxu0 0
      %796 = vmatpush1.bf16.msra.mxu0 %v774
      %797 = vmatprep.subr.bf16.mxu0 0
      %798 = vmatpush1.bf16.msra.mxu0 %v775
      %799 = vmatprep.subr.bf16.mxu0 0
      %800 = vmatpush1.bf16.msra.mxu0 %v776
      %801 = vmatprep.subr.bf16.mxu0 0
      %802 = vmatpush1.bf16.msra.mxu0 0
      %803 = vmatprep.subr.bf16.mxu0 0
      %804 = vmatpush1.bf16.msra.mxu0 0
      %805 = vmatprep.subr.bf16.mxu0 0
      %806 = vmatpush1.bf16.msra.mxu0 0
      %807 = vmatprep.subr.bf16.mxu0 0
      %808 = vmatpush1.bf16.msra.mxu0 0
      %809 = vmatprep.subr.bf16.mxu0 0
      %810 = vmatpush1.bf16.msra.mxu0 0
      %811 = vmatprep.subr.bf16.mxu0 0
      %812 = vmatpush1.bf16.msra.mxu0 0
      %813 = vmatprep.subr.bf16.mxu0 0
      %814 = vmatpush1.bf16.msra.mxu0 0
      %815 = vmatprep.subr.bf16.mxu0 0
      %816 = vmatpush1.bf16.msra.mxu0 0
      %817 = vmatprep.mubr.bf16.mxu0 0
      %818 = vmatmul.mubr.bf16.gmra.mrb[0].mxu0 %v632
      %v819 = vpop.f32.mrb[0].mxu0
      %v820 = vadd.f32 %v730, %v819
      %v821 = vpop.f32.mrb[0].mxu0
      %v822 = vpop.f32.mrb[0].mxu0
      %v823 = vadd.f32 %v733, %v822
      %v824 = vpop.f32.mrb[0].mxu0
      %825 = vdwg.mxu0
      %v826 = vld [vmem:[#allocation3] sm:$0xe]
      %s827 = scalar_lea.vmem %s3, 128
      %v828 = vld [vmem:[%s827] sm:$0xf]
      %v829 = vld [vmem:[%s827 + $0x4] sm:$0xf]
      %v830 = vld [vmem:[%s827 + $0x8] sm:$0xf]
      %v831 = vld [vmem:[%s827 + $0xc] sm:$0xf]
      %v832 = vld [vmem:[%s827 + $0x10] sm:$0xf]
      %v833 = vld [vmem:[%s827 + $0x14] sm:$0xf]
      %v834 = vld [vmem:[%s827 + $0x18] sm:$0xf]
      %v835 = vld [vmem:[%s827 + $0x1c] sm:$0xf]
      %v836 = vld [vmem:[%s827 + $0x20] sm:$0xf]
      %v837 = vld [vmem:[%s827 + $0x24] sm:$0xf]
      %v838 = vld [vmem:[%s827 + $0x28] sm:$0xf]
      %v839 = vld [vmem:[%s827 + $0x2c] sm:$0xf]
      %v840 = vld [vmem:[%s827 + $0x30] sm:$0xf]
      %v841 = vld [vmem:[%s827 + $0x34] sm:$0xf]
      %v842 = vld [vmem:[%s827 + $0x38] sm:$0xf]
      %v843 = vld [vmem:[%s827 + $0x3c] sm:$0xf]
      %v845 = vunpack.c.l.b16 %v826
      %v846 = vpack.c.b16 %v630, %v845
      %v847 = vrot.slane %v846, 1
      %v848 = vrot.slane %v633, 1
      %v849 = vsel %vm461, %v847, %v848
      %v867 = vunpack.c.l.b16 %v828
      %v868 = vunpack.c.l.b16 %v829
      %v869 = vunpack.c.l.b16 %v830
      %v870 = vunpack.c.l.b16 %v831
      %v871 = vunpack.c.l.b16 %v832
      %v872 = vunpack.c.l.b16 %v833
      %v873 = vunpack.c.l.b16 %v834
      %v874 = vunpack.c.l.b16 %v835
      %v875 = vunpack.c.l.b16 %v836
      %v876 = vunpack.c.l.b16 %v837
      %v877 = vunpack.c.l.b16 %v838
      %v878 = vunpack.c.l.b16 %v839
      %v879 = vunpack.c.l.b16 %v840
      %v880 = vunpack.c.l.b16 %v841
      %v881 = vunpack.c.l.b16 %v842
      %v882 = vunpack.c.l.b16 %v843
      %v883 = vpack.c.b16 %v868, %v867
      %v884 = vpack.c.b16 %v870, %v869
      %v885 = vpack.c.b16 %v872, %v871
      %v886 = vpack.c.b16 %v874, %v873
      %v887 = vpack.c.b16 %v876, %v875
      %v888 = vpack.c.b16 %v878, %v877
      %v889 = vpack.c.b16 %v880, %v879
      %v890 = vpack.c.b16 %v882, %v881
      %899 = vmatprep.subr.bf16.mxu0 0
      %900 = vmatpush1.bf16.msra.mxu0 %v883
      %901 = vmatprep.subr.bf16.mxu0 0
      %902 = vmatpush1.bf16.msra.mxu0 %v884
      %903 = vmatprep.subr.bf16.mxu0 0
      %904 = vmatpush1.bf16.msra.mxu0 %v885
      %905 = vmatprep.subr.bf16.mxu0 0
      %906 = vmatpush1.bf16.msra.mxu0 %v886
      %907 = vmatprep.subr.bf16.mxu0 0
      %908 = vmatpush1.bf16.msra.mxu0 %v887
      %909 = vmatprep.subr.bf16.mxu0 0
      %910 = vmatpush1.bf16.msra.mxu0 %v888
      %911 = vmatprep.subr.bf16.mxu0 0
      %912 = vmatpush1.bf16.msra.mxu0 %v889
      %913 = vmatprep.subr.bf16.mxu0 0
      %914 = vmatpush1.bf16.msra.mxu0 %v890
      %915 = vmatprep.subr.bf16.mxu0 0
      %916 = vmatpush1.bf16.msra.mxu0 0
      %917 = vmatprep.subr.bf16.mxu0 0
      %918 = vmatpush1.bf16.msra.mxu0 0
      %919 = vmatprep.subr.bf16.mxu0 0
      %920 = vmatpush1.bf16.msra.mxu0 0
      %921 = vmatprep.subr.bf16.mxu0 0
      %922 = vmatpush1.bf16.msra.mxu0 0
      %923 = vmatprep.subr.bf16.mxu0 0
      %924 = vmatpush1.bf16.msra.mxu0 0
      %925 = vmatprep.subr.bf16.mxu0 0
      %926 = vmatpush1.bf16.msra.mxu0 0
      %927 = vmatprep.subr.bf16.mxu0 0
      %928 = vmatpush1.bf16.msra.mxu0 0
      %929 = vmatprep.subr.bf16.mxu0 0
      %930 = vmatpush1.bf16.msra.mxu0 0
      %931 = vmatprep.mubr.bf16.mxu0 0
      %932 = vmatmul.mubr.bf16.gmra.mrb[0].mxu0 %v849
      %v933 = vpop.f32.mrb[0].mxu0
      %v934 = vadd.f32 0.0, %v933
      %v935 = vpop.f32.mrb[0].mxu0
      %v936 = vpop.f32.mrb[0].mxu0
      %v937 = vadd.f32 0.0, %v936
      %v938 = vpop.f32.mrb[0].mxu0
      %939 = vdwg.mxu0
      %v940 = vadd.f32 %v820, %v934
      %v941 = vadd.f32 %v823, %v937
      %v942 = vld [vmem:[%s4] sm:$0x1]
      %v944 = vlaneseq
      %v945 = vshrl.u32 %v944, 7
      %v946 = vsub.s32 0, %v945
      %v947 = vrot.slane %v942, %v946
      %v949 = vadd.f32 %v940, %v947
      %v950 = vadd.f32 %v941, %v947
      %v951 = vmax.f32 %v949, 0.0
      %v952 = vmax.f32 %v950, 0.0
      %953 = vst [vmem:[%s224] sm:$0xff] %v951
      %954 = vst [vmem:[%s224 + $0x8] sm:$0xff] %v952
      %p955 = scmp.lt.s32.totalorder %s16, 1
      %s956 = scalar_select %p955, %s16, 1
      %s957 = smul.addr %s956, 2
      %s958 = smul.addr %s957, 8
      %s959 = scalar_lea.vmem %s5, %s958
      // Predicated region
      $region41: #{conv_block_forward.1} parent=39 // pred_check
        %p960 = pneg %p144
      $region42: #{conv_block_forward.1} parent=39 // pred_check_branch
        %962 = sbr.rel (%p960) target = $region44
      $region43: #{conv_block_forward.1} parent=39 // pred_region
        _
      $region44: #{conv_block_forward.1} parent=39 // pred_fallthru
        _
    $region40: #{conv_block_forward.1} parent=5 // pred_fallthru
      _
    %p963 = scmp.le.s32.totalorder 2, %s11
    // Predicated region
    $region45: #{conv_block_forward.1} parent=5 // pred_check
      %p964 = pneg %p963
    $region46: #{conv_block_forward.1} parent=5 // pred_check_branch
      %966 = sbr.rel (%p964) target = $region48
    $region47: #{conv_block_forward.1} parent=5 // pred_region
      %s967 = ssub.s32 %s11, 2
      // Predicated region
      $region49: #{conv_block_forward.1} parent=47 // pred_check
        %p968 = pneg %p150
      $region50: #{conv_block_forward.1} parent=47 // pred_check_branch
        %970 = sbr.rel (%p968) target = $region52
      $region51: #{conv_block_forward.1} parent=47 // pred_region
        %p971 = scmp.lt.s32.totalorder %s17, 1
        %s972 = scalar_select %p971, %s17, 1
        %s973 = smul.addr %s972, 2
        %s974 = smul.addr %s973, 8
        %s975 = scalar_lea.vmem %s5, %s974
      $region52: #{conv_block_forward.1} parent=47 // pred_fallthru
        _
    $region48: #{conv_block_forward.1} parent=5 // pred_fallthru
      _
  $region6: #{conv_block_forward.1} parent=0 // loop_footer
    %s15 = sadd.s32 1, %s11
  $region7: #{conv_block_forward.1} parent=0 // loop_footer_branch
    %10 = sbr.rel target = $region3
  $region8: #{conv_block_forward.1} parent=0 // loop_exit
    _

</llo_original>
